<compile_context>
chip_gen: v5e
topology: v5e:2x2
jax: 0.10.0
libtpu: 0.0.40
codegen_flags: <defaults>
</compile_context>

<pallas_src>
import functools

import jax
import jax.numpy as jnp
from jax import lax
from jax.experimental import pallas as pl
from jax.experimental.pallas import tpu as pltpu


def _attention_kernel(*refs, G, Dh, has_proj, acc_into_out):
    """One (batch, head-group) grid step: fused qkv-proj + attention + out-proj."""
    if has_proj:
        x_ref, wqkv_ref, wo_ref, bo_ref, o_ref, *scratch = refs
    else:
        x_ref, wqkv_ref, o_ref, *scratch = refs

    hg = pl.program_id(1)
    n_hg = pl.num_programs(1)
    gd = G * Dh

    x = x_ref[0]                    # (N, D), native dtype (bf16 -> fast MXU path)
    cdt = x.dtype

    # Single fused QKV projection for this head group (weights resident in VMEM,
    # head group selected by in-kernel dynamic index). f32 accumulation on MXU.
    qkv = jnp.dot(x, wqkv_ref[hg], preferred_element_type=jnp.float32)   # (N, 3*gd)
    q = qkv[:, 0 * gd:1 * gd].astype(cdt)    # softmax scale already folded into Wq
    k = qkv[:, 1 * gd:2 * gd].astype(cdt)
    v = qkv[:, 2 * gd:3 * gd].astype(cdt)

    # Per-head attention inside the group (static unrolled loop; slices are static).
    outs = []
    for g in range(G):
        sl = slice(g * Dh, (g + 1) * Dh)
        # scores = q_g @ k_g^T  (contract head dim of both operands; no transpose copy)
        s = lax.dot_general(q[:, sl], k[:, sl], (((1,), (1,)), ((), ())),
                            preferred_element_type=jnp.float32)          # (N, N)
        m = jnp.max(s, axis=-1, keepdims=True)
        p = jnp.exp(s - m)
        denom = jnp.sum(p, axis=-1, keepdims=True)
        p = (p * pl.reciprocal(denom, approx=True)).astype(cdt)
        outs.append(jnp.dot(p, v[:, sl], preferred_element_type=jnp.float32))  # (N, Dh)
    o_heads = outs[0] if G == 1 else jnp.concatenate(outs, axis=-1)      # (N, gd) f32

    if not has_proj:
        # to_out == nn.Identity() (heads == 1, dim_head == dim): write straight out.
        o_ref[0] = o_heads.astype(o_ref.dtype)
        return

    # Fold this head group straight into the output projection.
    contrib = jnp.dot(o_heads.astype(cdt), wo_ref[hg],
                      preferred_element_type=jnp.float32)                # (N, D) f32
    bias = bo_ref[...].astype(jnp.float32)                               # (1, D)

    if acc_into_out:
        # f32 output: accumulate directly into the resident output block
        # (no extra scratch buffer, no final copy pass).
        @pl.when(hg == 0)
        def _():
            o_ref[0] = (contrib + bias).astype(o_ref.dtype)

        @pl.when(hg > 0)
        def _():
            o_ref[0] = o_ref[0] + contrib.astype(o_ref.dtype)
    else:
        # Non-f32 output (e.g. bf16): keep a f32 VMEM accumulator for precision.
        acc_ref = scratch[0]

        @pl.when(hg == 0)
        def _():
            acc_ref[...] = contrib + bias

        @pl.when(hg > 0)
        def _():
            acc_ref[...] += contrib

        @pl.when(hg == n_hg - 1)
        def _():
            o_ref[0] = acc_ref[...].astype(o_ref.dtype)


def _pick_group(heads, dim_head):
    """Largest divisor of `heads` with group*dim_head >= 256 when possible (<= 512)."""
    target = max(1, 256 // max(1, dim_head))
    g = 1
    for cand in range(1, heads + 1):
        if heads % cand != 0 or cand * dim_head > 512:
            continue
        g = cand
        if cand >= target:
            break
    return g


def _prep_qkv_weights(w_qkv, dim, heads, dim_head, group, scale):
    """Pack Wq|Wk|Wv per head-group -> (H//G, D, 3*G*Dh), scale folded into Wq."""
    inner = heads * dim_head
    assert w_qkv.shape == (dim, 3 * inner), w_qkv.shape
    ng = heads // group
    gd = group * dim_head
    wq = (w_qkv[:, 0 * inner:1 * inner].astype(jnp.float32) * scale).astype(w_qkv.dtype)
    wk = w_qkv[:, 1 * inner:2 * inner]
    wv = w_qkv[:, 2 * inner:3 * inner]
    blocks = [w.reshape(dim, ng, gd) for w in (wq, wk, wv)]
    wqkv_g = jnp.concatenate(blocks, axis=-1)            # (D, ng, 3*gd)
    return jnp.transpose(wqkv_g, (1, 0, 2))              # (ng, D, 3*gd)


def attention_pallas(x, wqkv_g, wo_g, bo, *, heads, dim_head, group):
    """x: (B, N, D); wqkv_g: (H//G, D, 3*G*Dh); wo_g: (H//G, G*Dh, D) or None; bo: (1, D) or None."""
    B, N, D = x.shape
    H, Dh, G = heads, dim_head, group
    ng = H // G
    gd = G * Dh
    has_proj = wo_g is not None
    cdt = x.dtype
    out_dtype = x.dtype
    acc_into_out = (out_dtype == jnp.float32)

    # Keep MXU operands in the compute dtype (bf16 inputs -> bf16-in/f32-acc fast path).
    wqkv_g = wqkv_g.astype(cdt)

    inputs = [x, wqkv_g]
    in_specs = [
        pl.BlockSpec((1, N, D), lambda b, hg: (b, 0, 0)),          # x: re-fetched only when b changes
        pl.BlockSpec((ng, D, 3 * gd), lambda b, hg: (0, 0, 0)),    # fused QKV weights: resident
    ]
    if has_proj:
        wo_g = wo_g.astype(cdt)
        bo = bo.astype(jnp.float32)
        inputs += [wo_g, bo]
        in_specs += [
            pl.BlockSpec((ng, gd, D), lambda b, hg: (0, 0, 0)),    # out-proj weights: resident
            pl.BlockSpec((1, D), lambda b, hg: (0, 0)),            # out-proj bias
        ]

    scratch_shapes = [] if acc_into_out else [pltpu.VMEM((N, D), jnp.float32)]

    # Scoped-VMEM budget (v5e default is only 16 MiB): blocks + resident weights
    # + rough per-step working set, with headroom.
    isz = jnp.dtype(cdt).itemsize
    needed = (
        2 * N * D * isz                                           # x (double-buffered)
        + 2 * N * D * jnp.dtype(out_dtype).itemsize               # out
        + 2 * wqkv_g.size * isz
        + (2 * (wo_g.size * isz + D * 4) if has_proj else 0)
        + (0 if acc_into_out else N * D * 4)
        + N * (5 * gd + 2 * N + D) * 4                            # qkv / scores / probs / contrib
    )
    vmem_limit = int(min(100 * 1024 * 1024, max(32 * 1024 * 1024, needed * 3 // 2)))

    kernel = functools.partial(_attention_kernel, G=G, Dh=Dh,
                               has_proj=has_proj, acc_into_out=acc_into_out)
    return pl.pallas_call(
        kernel,
        out_shape=jax.ShapeDtypeStruct((B, N, D), out_dtype),
        grid=(B, ng),
        in_specs=in_specs,
        out_specs=pl.BlockSpec((1, N, D), lambda b, hg: (b, 0, 0)),
        scratch_shapes=scratch_shapes,
        compiler_params=pltpu.CompilerParams(
            dimension_semantics=("parallel", "arbitrary"),         # B -> megacore, head-groups -> reduction
            vmem_limit_bytes=vmem_limit),
    )(*inputs)


class AttentionPallas:
    """Mirror of the PyTorch Attention module (inference; Dropout(p=0.0) is identity)."""

    def __init__(self, dim, heads=8, dim_head=64, *, w_qkv, w_out=None, b_out=None,
                 group_heads=None):
        self.dim = dim
        self.heads = heads
        self.dim_head = dim_head
        inner = heads * dim_head
        self.project_out = not (heads == 1 and dim_head == dim)
        self.group = group_heads if group_heads else _pick_group(heads, dim_head)
        assert heads % self.group == 0

        scale = float(dim_head) ** -0.5
        # Weight layout transforms happen ONCE here (not per forward call);
        # the softmax scale is folded into Wq.
        self.wqkv_g = _prep_qkv_weights(w_qkv, dim, heads, dim_head, self.group, scale)
        if self.project_out:
            assert w_out is not None and b_out is not None
            assert w_out.shape == (inner, dim) and b_out.shape == (dim,)
            ng = heads // self.group
            self.wo_g = w_out.reshape(ng, self.group * dim_head, dim)
            self.bo = b_out.reshape(1, dim)
        else:
            # to_out == nn.Identity(): no projection matmul, no identity weight.
            self.wo_g = None
            self.bo = None

    def __call__(self, x):
        return attention_pallas(x, self.wqkv_g, self.wo_g, self.bo,
                                heads=self.heads, dim_head=self.dim_head,
                                group=self.group)


def _attention_ref(x, w_qkv, w_out, b_out, heads, dim_head):
    """Pure-JAX reference matching the PyTorch forward."""
    B, N, D = x.shape
    inner = heads * dim_head
    hi = jax.lax.Precision.HIGHEST
    qkv = jnp.einsum("bnd,de->bne", x, w_qkv, precision=hi)
    q, k, v = jnp.split(qkv, 3, axis=-1)
    to_heads = lambda t: t.reshape(B, N, heads, dim_head).transpose(0, 2, 1, 3)
    q, k, v = map(to_heads, (q, k, v))
    dots = jnp.einsum("bhid,bhjd->bhij", q, k, precision=hi) * (dim_head ** -0.5)
    attn = jax.nn.softmax(dots, axis=-1)
    out = jnp.einsum("bhij,bhjd->bhid", attn, v, precision=hi)
    out = out.transpose(0, 2, 1, 3).reshape(B, N, inner)
    return jnp.einsum("bne,ed->bnd", out, w_out, precision=hi) + b_out


if __name__ == "__main__":
    key = jax.random.PRNGKey(0)
    k_x, k_qkv, k_o, k_b, k_qkv4, k_o4, k_b4, k_q1 = jax.random.split(key, 8)

    B, N, dim = 2, 128, 128

    x = jax.random.normal(k_x, (B, N, dim), dtype=jnp.float32)

    # ---- case A: heads=2, dim_head=64 (single head-group), f32, tight check ----
    heads, dim_head = 2, 64
    inner = heads * dim_head
    w_qkv = jax.random.normal(k_qkv, (dim, 3 * inner), jnp.float32) / jnp.sqrt(dim)
    w_out = jax.random.normal(k_o, (inner, dim), jnp.float32) / jnp.sqrt(inner)
    b_out = 0.1 * jax.random.normal(k_b, (dim,), jnp.float32)

    attn = AttentionPallas(dim, heads=heads, dim_head=dim_head,
                           w_qkv=w_qkv, w_out=w_out, b_out=b_out)
    out = jax.block_until_ready(attn(x))
    ref = _attention_ref(x, w_qkv, w_out, b_out, heads, dim_head)
    assert out.shape == (B, N, dim)
    assert jnp.allclose(out, ref, atol=2e-2, rtol=2e-2), "case A mismatch vs reference"

    # ---- case B: heads=4, dim_head=64, forced group=2 -> 2 head-groups,
    #              exercises accumulation straight into the f32 output block ----
    heads4, dh4 = 4, 64
    inner4 = heads4 * dh4
    w_qkv4 = jax.random.normal(k_qkv4, (dim, 3 * inner4), jnp.float32) / jnp.sqrt(dim)
    w_out4 = jax.random.normal(k_o4, (inner4, dim), jnp.float32) / jnp.sqrt(inner4)
    b_out4 = 0.1 * jax.random.normal(k_b4, (dim,), jnp.float32)

    attn4 = AttentionPallas(dim, heads=heads4, dim_head=dh4,
                            w_qkv=w_qkv4, w_out=w_out4, b_out=b_out4, group_heads=2)
    out4 = jax.block_until_ready(attn4(x))
    ref4 = _attention_ref(x, w_qkv4, w_out4, b_out4, heads4, dh4)
    assert jnp.allclose(out4, ref4, atol=2e-2, rtol=2e-2), "case B mismatch vs reference"

    # ---- case C: same config in bf16 (bf16-in / f32-acc MXU fast path +
    #              f32 scratch accumulator), loose check ----
    attn4_bf16 = AttentionPallas(dim, heads=heads4, dim_head=dh4,
                                 w_qkv=w_qkv4.astype(jnp.bfloat16),
                                 w_out=w_out4.astype(jnp.bfloat16),
                                 b_out=b_out4.astype(jnp.bfloat16), group_heads=2)
    out4_bf16 = jax.block_until_ready(attn4_bf16(x.astype(jnp.bfloat16)))
    out4_bf16_f32 = out4_bf16.astype(jnp.float32)
    assert out4_bf16.dtype == jnp.bfloat16 and out4_bf16.shape == (B, N, dim)
    assert bool(jnp.all(jnp.isfinite(out4_bf16_f32)))
    assert jnp.allclose(out4_bf16_f32, ref4, atol=0.15, rtol=0.15), "case C (bf16) mismatch"

    # ---- case D: heads=1, dim_head=dim -> project_out=False (to_out == Identity) ----
    heads1, dh1 = 1, dim
    w_qkv1 = jax.random.normal(k_q1, (dim, 3 * heads1 * dh1), jnp.float32) / jnp.sqrt(dim)
    attn_id = AttentionPallas(dim, heads=heads1, dim_head=dh1, w_qkv=w_qkv1)
    out_id = jax.block_until_ready(attn_id(x))
    ref_id = _attention_ref(x, w_qkv1, jnp.eye(dh1, dtype=jnp.float32),
                            jnp.zeros((dim,), jnp.float32), heads1, dh1)
    assert jnp.allclose(out_id, ref_id, atol=2e-2, rtol=2e-2), "case D (identity) mismatch"

    print("KERNEL_OK")
</pallas_src>

<mosaic_0001>
module attributes {stable_mosaic.version = 11 : i64} {
  func.func @_attention_kernel(%arg0: i32, %arg1: i32, %arg2: memref<1x128x128xf32, #tpu.memory_space<vmem>>, %arg3: memref<1x128x384xf32, #tpu.memory_space<vmem>>, %arg4: memref<1x128x128xf32, #tpu.memory_space<vmem>>, %arg5: memref<1x128xf32, #tpu.memory_space<vmem>>, %arg6: memref<1x128x128xf32, #tpu.memory_space<vmem>>) attributes {dimension_semantics = [#tpu.dimension_semantics<parallel>, #tpu.dimension_semantics<arbitrary>], iteration_bounds = array<i64: 2, 1>, scalar_prefetch = 0 : i64, scratch_operands = 0 : i64, tpu.core_type = #tpu.core_type<tc>, window_params = [{transform_indices = @transform_0, window_bounds = array<i64: 1, 128, 128>}, {pipeline_mode = #tpu.pipeline_mode<synchronous>, transform_indices = @transform_1, window_bounds = array<i64: 1, 128, 384>}, {pipeline_mode = #tpu.pipeline_mode<synchronous>, transform_indices = @transform_2, window_bounds = array<i64: 1, 128, 128>}, {pipeline_mode = #tpu.pipeline_mode<synchronous>, transform_indices = @transform_3, window_bounds = array<i64: 1, 128>}, {transform_indices = @transform_4, window_bounds = array<i64: 1, 128, 128>}]} {
    %c0 = arith.constant 0 : index
    %c0_0 = arith.constant 0 : index
    %c0_1 = arith.constant 0 : index
    %0 = vector.load %arg2[%c0, %c0_0, %c0_1] : memref<1x128x128xf32, #tpu.memory_space<vmem>>, vector<1x128x128xf32>
    %1 = vector.shape_cast %0 : vector<1x128x128xf32> to vector<128x128xf32>
    %2 = arith.index_cast %arg1 : i32 to index
    %c0_2 = arith.constant 0 : index
    %c0_3 = arith.constant 0 : index
    %3 = vector.load %arg3[%2, %c0_2, %c0_3] : memref<1x128x384xf32, #tpu.memory_space<vmem>>, vector<1x128x384xf32>
    %4 = vector.shape_cast %3 : vector<1x128x384xf32> to vector<128x384xf32>
    %cst = arith.constant dense<0.000000e+00> : vector<128x384xf32>
    %5 = tpu.matmul %1, %4, %cst {dimension_numbers = #tpu.dot_dimension_numbers<[1], [0], [0], [1], [0, 0, 1, 1], [], []>} : vector<128x128xf32>, vector<128x384xf32>, vector<128x384xf32> -> vector<128x384xf32>
    %6 = vector.extract_strided_slice %5 {offsets = [0, 0], sizes = [128, 128], strides = [1, 1]} : vector<128x384xf32> to vector<128x128xf32>
    %7 = vector.extract_strided_slice %5 {offsets = [0, 128], sizes = [128, 128], strides = [1, 1]} : vector<128x384xf32> to vector<128x128xf32>
    %8 = vector.extract_strided_slice %5 {offsets = [0, 256], sizes = [128, 128], strides = [1, 1]} : vector<128x384xf32> to vector<128x128xf32>
    %9 = vector.extract_strided_slice %6 {offsets = [0, 0], sizes = [128, 64], strides = [1, 1]} : vector<128x128xf32> to vector<128x64xf32>
    %10 = vector.extract_strided_slice %7 {offsets = [0, 0], sizes = [128, 64], strides = [1, 1]} : vector<128x128xf32> to vector<128x64xf32>
    %cst_4 = arith.constant dense<0.000000e+00> : vector<128x128xf32>
    %11 = tpu.matmul %9, %10, %cst_4 {dimension_numbers = #tpu.dot_dimension_numbers<[1], [1], [0], [0], [0, 0, 1, 0], [], []>} : vector<128x64xf32>, vector<128x64xf32>, vector<128x128xf32> -> vector<128x128xf32>
    %cst_5 = arith.constant dense<0xFF800000> : vector<128xf32>
    %12 = vector.multi_reduction <maximumf>, %11, %cst_5 [1] : vector<128x128xf32> to vector<128xf32>
    %13 = vector.shape_cast %12 : vector<128xf32> to vector<128x1xf32>
    %14 = vector.broadcast %13 : vector<128x1xf32> to vector<128x128xf32>
    %15 = arith.subf %11, %14 : vector<128x128xf32>
    %16 = math.exp %15 : vector<128x128xf32>
    %cst_6 = arith.constant dense<0.000000e+00> : vector<128xf32>
    %17 = vector.multi_reduction <add>, %16, %cst_6 [1] : vector<128x128xf32> to vector<128xf32>
    %18 = vector.shape_cast %17 : vector<128xf32> to vector<128x1xf32>
    %19 = tpu.reciprocal %18 {approx = true} : vector<128x1xf32> -> vector<128x1xf32>
    %20 = vector.broadcast %19 : vector<128x1xf32> to vector<128x128xf32>
    %21 = arith.mulf %16, %20 : vector<128x128xf32>
    %22 = vector.extract_strided_slice %8 {offsets = [0, 0], sizes = [128, 64], strides = [1, 1]} : vector<128x128xf32> to vector<128x64xf32>
    %cst_7 = arith.constant dense<0.000000e+00> : vector<128x64xf32>
    %23 = tpu.matmul %21, %22, %cst_7 {dimension_numbers = #tpu.dot_dimension_numbers<[1], [0], [0], [1], [0, 0, 1, 1], [], []>} : vector<128x128xf32>, vector<128x64xf32>, vector<128x64xf32> -> vector<128x64xf32>
    %24 = vector.extract_strided_slice %6 {offsets = [0, 64], sizes = [128, 64], strides = [1, 1]} : vector<128x128xf32> to vector<128x64xf32>
    %25 = vector.extract_strided_slice %7 {offsets = [0, 64], sizes = [128, 64], strides = [1, 1]} : vector<128x128xf32> to vector<128x64xf32>
    %cst_8 = arith.constant dense<0.000000e+00> : vector<128x128xf32>
    %26 = tpu.matmul %24, %25, %cst_8 {dimension_numbers = #tpu.dot_dimension_numbers<[1], [1], [0], [0], [0, 0, 1, 0], [], []>} : vector<128x64xf32>, vector<128x64xf32>, vector<128x128xf32> -> vector<128x128xf32>
    %cst_9 = arith.constant dense<0xFF800000> : vector<128xf32>
    %27 = vector.multi_reduction <maximumf>, %26, %cst_9 [1] : vector<128x128xf32> to vector<128xf32>
    %28 = vector.shape_cast %27 : vector<128xf32> to vector<128x1xf32>
    %29 = vector.broadcast %28 : vector<128x1xf32> to vector<128x128xf32>
    %30 = arith.subf %26, %29 : vector<128x128xf32>
    %31 = math.exp %30 : vector<128x128xf32>
    %cst_10 = arith.constant dense<0.000000e+00> : vector<128xf32>
    %32 = vector.multi_reduction <add>, %31, %cst_10 [1] : vector<128x128xf32> to vector<128xf32>
    %33 = vector.shape_cast %32 : vector<128xf32> to vector<128x1xf32>
    %34 = tpu.reciprocal %33 {approx = true} : vector<128x1xf32> -> vector<128x1xf32>
    %35 = vector.broadcast %34 : vector<128x1xf32> to vector<128x128xf32>
    %36 = arith.mulf %31, %35 : vector<128x128xf32>
    %37 = vector.extract_strided_slice %8 {offsets = [0, 64], sizes = [128, 64], strides = [1, 1]} : vector<128x128xf32> to vector<128x64xf32>
    %cst_11 = arith.constant dense<0.000000e+00> : vector<128x64xf32>
    %38 = tpu.matmul %36, %37, %cst_11 {dimension_numbers = #tpu.dot_dimension_numbers<[1], [0], [0], [1], [0, 0, 1, 1], [], []>} : vector<128x128xf32>, vector<128x64xf32>, vector<128x64xf32> -> vector<128x64xf32>
    %39 = tpu.concatenate %23, %38 in 1 : vector<128x64xf32>, vector<128x64xf32> -> vector<128x128xf32>
    %40 = arith.index_cast %arg1 : i32 to index
    %c0_12 = arith.constant 0 : index
    %c0_13 = arith.constant 0 : index
    %41 = vector.load %arg4[%40, %c0_12, %c0_13] : memref<1x128x128xf32, #tpu.memory_space<vmem>>, vector<1x128x128xf32>
    %42 = vector.shape_cast %41 : vector<1x128x128xf32> to vector<128x128xf32>
    %cst_14 = arith.constant dense<0.000000e+00> : vector<128x128xf32>
    %43 = tpu.matmul %39, %42, %cst_14 {dimension_numbers = #tpu.dot_dimension_numbers<[1], [0], [0], [1], [0, 0, 1, 1], [], []>} : vector<128x128xf32>, vector<128x128xf32>, vector<128x128xf32> -> vector<128x128xf32>
    %c0_15 = arith.constant 0 : index
    %c0_16 = arith.constant 0 : index
    %44 = vector.load %arg5[%c0_15, %c0_16] : memref<1x128xf32, #tpu.memory_space<vmem>>, vector<1x128xf32>
    %c0_i32 = arith.constant 0 : i32
    %45 = arith.cmpi eq, %arg1, %c0_i32 : i32
    %46 = arith.extui %45 : i1 to i32
    %c0_i32_17 = arith.constant 0 : i32
    %47 = arith.cmpi ne, %46, %c0_i32_17 : i32
    scf.if %47 {
      %51 = vector.broadcast %44 : vector<1x128xf32> to vector<128x128xf32>
      %52 = arith.addf %43, %51 : vector<128x128xf32>
      %c0_20 = arith.constant 0 : index
      %c0_21 = arith.constant 0 : index
      %c0_22 = arith.constant 0 : index
      %53 = vector.load %arg6[%c0_20, %c0_21, %c0_22] : memref<1x128x128xf32, #tpu.memory_space<vmem>>, vector<1x128x128xf32>
      %54 = vector.shape_cast %53 : vector<1x128x128xf32> to vector<128x128xf32>
      %55 = vector.shape_cast %52 : vector<128x128xf32> to vector<1x128x128xf32>
      tpu.vector_store %arg6[%c0_20, %c0_21, %c0_22], %55 {strides = array<i32>} : memref<1x128x128xf32, #tpu.memory_space<vmem>>, vector<1x128x128xf32>,
    } else {
    }
    %c0_i32_18 = arith.constant 0 : i32
    %48 = arith.cmpi sgt, %arg1, %c0_i32_18 : i32
    %49 = arith.extui %48 : i1 to i32
    %c0_i32_19 = arith.constant 0 : i32
    %50 = arith.cmpi ne, %49, %c0_i32_19 : i32
    scf.if %50 {
      %c0_20 = arith.constant 0 : index
      %c0_21 = arith.constant 0 : index
      %c0_22 = arith.constant 0 : index
      %51 = vector.load %arg6[%c0_20, %c0_21, %c0_22] : memref<1x128x128xf32, #tpu.memory_space<vmem>>, vector<1x128x128xf32>
      %52 = vector.shape_cast %51 : vector<1x128x128xf32> to vector<128x128xf32>
      %53 = arith.addf %52, %43 : vector<128x128xf32>
      %c0_23 = arith.constant 0 : index
      %c0_24 = arith.constant 0 : index
      %c0_25 = arith.constant 0 : index
      %54 = vector.load %arg6[%c0_23, %c0_24, %c0_25] : memref<1x128x128xf32, #tpu.memory_space<vmem>>, vector<1x128x128xf32>
      %55 = vector.shape_cast %54 : vector<1x128x128xf32> to vector<128x128xf32>
      %56 = vector.shape_cast %53 : vector<128x128xf32> to vector<1x128x128xf32>
      tpu.vector_store %arg6[%c0_23, %c0_24, %c0_25], %56 {strides = array<i32>} : memref<1x128x128xf32, #tpu.memory_space<vmem>>, vector<1x128x128xf32>,
    } else {
    }
    return
  }
  func.func @transform_0(%arg0: i32, %arg1: i32) -> (i32, i32, i32) {
    %c0_i32 = arith.constant 0 : i32
    %c0_i32_0 = arith.constant 0 : i32
    %c0_i32_1 = arith.constant 0 : i32
    return %arg0, %c0_i32, %c0_i32_0 : i32, i32, i32
  }
  func.func @transform_1(%arg0: i32, %arg1: i32) -> (i32, i32, i32) {
    %c0_i32 = arith.constant 0 : i32
    %c0_i32_0 = arith.constant 0 : i32
    %c0_i32_1 = arith.constant 0 : i32
    %c0_i32_2 = arith.constant 0 : i32
    return %c0_i32, %c0_i32_0, %c0_i32_1 : i32, i32, i32
  }
  func.func @transform_2(%arg0: i32, %arg1: i32) -> (i32, i32, i32) {
    %c0_i32 = arith.constant 0 : i32
    %c0_i32_0 = arith.constant 0 : i32
    %c0_i32_1 = arith.constant 0 : i32
    %c0_i32_2 = arith.constant 0 : i32
    return %c0_i32, %c0_i32_0, %c0_i32_1 : i32, i32, i32
  }
  func.func @transform_3(%arg0: i32, %arg1: i32) -> (i32, i32) {
    %c0_i32 = arith.constant 0 : i32
    %c0_i32_0 = arith.constant 0 : i32
    %c0_i32_1 = arith.constant 0 : i32
    return %c0_i32, %c0_i32_0 : i32, i32
  }
  func.func @transform_4(%arg0: i32, %arg1: i32) -> (i32, i32, i32) {
    %c0_i32 = arith.constant 0 : i32
    %c0_i32_0 = arith.constant 0 : i32
    %c0_i32_1 = arith.constant 0 : i32
    return %arg0, %c0_i32, %c0_i32_0 : i32, i32, i32
  }
}

</mosaic_0001>

<llo_original>
// kernel: tpu_custom_call.1
$region0: #{tpu_custom_call.1}
  #allocation0 [shape = 'u32[]', space=smem, size = 0x4, offset = 0x4, fixed_abs, tag = 'smem constant byte address 0x4 - core index']
  #allocation1 [shape = 'u32[72,128]{1,0:T(1,128)}', space=vmem, size = 0x9000, scoped, tag = 'internal scratch']
  %s0 = inlined_call_operand.hbm [shape: f32[2,128,128], index: 0, kind: input, shape index: {}]
  %s1 = inlined_call_operand.hbm [shape: f32[1,128,384], index: 1, kind: input, shape index: {}]
  %s2 = inlined_call_operand.hbm [shape: f32[1,128,128], index: 2, kind: input, shape index: {}]
  %s3 = inlined_call_operand.vmem [shape: f32[1,128], index: 3, kind: input, shape index: {}]
  %s4 = inlined_call_operand.hbm [shape: f32[2,128,128], index: 4, kind: output, shape index: {}]
  %s5 = sld [smem:[#allocation0]]
  $region69: #{tpu_custom_call.1} parent=0
    _
  %s7 = ssub.s32 1, %s5
  %s8 = scalar_select 0, %s7, %s5
  $region1: #{tpu_custom_call.1} parent=0
    #allocation2 [shape = 'u8[131072]{0}', space=vmem, size = 0x20000, scoped, tag = 'input window, operand 0']
    #allocation3 [shape = 's32[2]{0}', space=sflag, size = 0x8, scoped, tag = 'scoped memory for tpu_custom_call.1']
    #allocation4 [shape = 's32[2]{0}', space=sflag, size = 0x8, scoped, tag = 'scoped memory for tpu_custom_call.1']
    #allocation5 [shape = 'u8[196608]{0}', space=vmem, size = 0x30000, scoped, tag = 'input window, operand 1, single buffered']
    #allocation6 [shape = 's32[1]{0}', space=sflag, size = 0x4, scoped, tag = 'scoped memory for tpu_custom_call.1']
    #allocation7 [shape = 'u8[65536]{0}', space=vmem, size = 0x10000, scoped, tag = 'input window, operand 2, single buffered']
    #allocation8 [shape = 'u8[131072]{0}', space=vmem, size = 0x20000, scoped, tag = 'output window, operand 0']
    %9 = vsyncpa [#allocation3], 0
    %s10 = scalar_lea.sflag [#allocation3], 1
    %11 = vsyncpa %s10, 0
    %12 = vsyncpa [#allocation6], 0
    %13 = vsyncpa [#allocation4], 0
    %s14 = scalar_lea.sflag [#allocation4], 1
    %15 = vsyncpa %s14, 0
    loop: start=0, step=1, limit=4
    $region2: #{tpu_custom_call.1} parent=1 // loop_pre_header
      _
    $region3: #{tpu_custom_call.1} parent=1 // loop_header
      %s17 = sphi 0, %s21
      %p18 = scmp.ge.s32.totalorder %s17, 4
      %s24 = sphi 0, %s36
      %s25 = sphi 0, %s32
      %s26 = sphi 0, %s24
      %s27 = sphi 0, %s25
      %s28 = sphi 0, %s26
      %s29 = sphi 0, %s27
      %s39 = sphi 0, %s41
      %s42 = sphi 0, %s39
      %s43 = sphi 0, %s42
      %s59 = sphi 0, %s43
      %s63 = sphi 0, %s63
      %s65 = sphi 0, %s63
      %s66 = sphi 0, %s65
      %s80 = sphi 0, %s66
      %s84 = sphi 0, %s84
      %s86 = sphi 0, %s84
      %s87 = sphi 0, %s86
      %s101 = sphi 0, %s87
      %s105 = sphi 0, %s105
      %s107 = sphi 0, %s105
      %s108 = sphi 0, %s107
      %s122 = sphi 0, %s108
      %s128 = sphi 0, %s130
      %s131 = sphi 0, %s128
      %s132 = sphi 0, %s131
      %s148 = sphi 0, %s132
    $region4: #{tpu_custom_call.1} parent=1 // loop_header_branch
      %20 = sbr.rel (%p18) target = $region8
    $region5: #{tpu_custom_call.1} parent=1 // loop_body
      %s22 = ssub.s32 %s17, 1
      %s23 = ssub.s32 %s17, 2
      %s30 = sadd.s32 1, %s25
      %p31 = scmp.ge.s32.totalorder %s30, 1
      %s32 = scalar_select %p31, 0, %s30
      %s33 = sadd.s32 1, %s24
      %s34 = scalar_select %p31, %s33, %s24
      %p35 = scmp.ge.s32.totalorder %s34, 2
      %s36 = scalar_select %p35, 0, %s34
      %s37 = ssub.s32 %s24, %s36
      %p38 = scmp.eq.s32.totalorder %s37, 0
      %s40 = sadd.s32 %s39, 1
      %s41 = scalar_select %p38, %s39, %s40
      %p44 = pneg %p38
      %p45 = scmp.eq.s32.totalorder %s17, 1
      %p46 = por %p44, %p45
      %p47 = scmp.ne.s32.totalorder %s39, %s42
      %p48 = scmp.eq.s32.totalorder %s17, 0
      %p49 = por %p47, %p48
      %p50 = scmp.ne.s32.totalorder %s39, %s42
      %p51 = scmp.eq.s32.totalorder %s22, 1
      %p52 = por %p50, %p51
      %p53 = scmp.ne.s32.totalorder %s42, %s43
      %p54 = scmp.eq.s32.totalorder %s22, 0
      %p55 = por %p53, %p54
      %p56 = scmp.ne.s32.totalorder %s42, %s43
      %p57 = scmp.eq.s32.totalorder %s23, 1
      %p58 = por %p56, %p57
      %p60 = scmp.ne.s32.totalorder %s43, %s59
      %p61 = scmp.eq.s32.totalorder %s23, 0
      %p62 = por %p60, %p61
      %s64 = sadd.s32 %s63, 1
      %p67 = scmp.eq.s32.totalorder %s17, 1
      %p68 = scmp.ne.s32.totalorder %s63, %s65
      %p69 = scmp.eq.s32.totalorder %s17, 0
      %p70 = por %p68, %p69
      %p71 = scmp.ne.s32.totalorder %s63, %s65
      %p72 = scmp.eq.s32.totalorder %s22, 1
      %p73 = por %p71, %p72
      %p74 = scmp.ne.s32.totalorder %s65, %s66
      %p75 = scmp.eq.s32.totalorder %s22, 0
      %p76 = por %p74, %p75
      %p77 = scmp.ne.s32.totalorder %s65, %s66
      %p78 = scmp.eq.s32.totalorder %s23, 1
      %p79 = por %p77, %p78
      %p81 = scmp.ne.s32.totalorder %s66, %s80
      %p82 = scmp.eq.s32.totalorder %s23, 0
      %p83 = por %p81, %p82
      %s85 = sadd.s32 %s84, 1
      %p88 = scmp.eq.s32.totalorder %s17, 1
      %p89 = scmp.ne.s32.totalorder %s84, %s86
      %p90 = scmp.eq.s32.totalorder %s17, 0
      %p91 = por %p89, %p90
      %p92 = scmp.ne.s32.totalorder %s84, %s86
      %p93 = scmp.eq.s32.totalorder %s22, 1
      %p94 = por %p92, %p93
      %p95 = scmp.ne.s32.totalorder %s86, %s87
      %p96 = scmp.eq.s32.totalorder %s22, 0
      %p97 = por %p95, %p96
      %p98 = scmp.ne.s32.totalorder %s86, %s87
      %p99 = scmp.eq.s32.totalorder %s23, 1
      %p100 = por %p98, %p99
      %p102 = scmp.ne.s32.totalorder %s87, %s101
      %p103 = scmp.eq.s32.totalorder %s23, 0
      %p104 = por %p102, %p103
      %s106 = sadd.s32 %s105, 1
      %p109 = scmp.eq.s32.totalorder %s17, 1
      %p110 = scmp.ne.s32.totalorder %s105, %s107
      %p111 = scmp.eq.s32.totalorder %s17, 0
      %p112 = por %p110, %p111
      %p113 = scmp.ne.s32.totalorder %s105, %s107
      %p114 = scmp.eq.s32.totalorder %s22, 1
      %p115 = por %p113, %p114
      %p116 = scmp.ne.s32.totalorder %s107, %s108
      %p117 = scmp.eq.s32.totalorder %s22, 0
      %p118 = por %p116, %p117
      %p119 = scmp.ne.s32.totalorder %s107, %s108
      %p120 = scmp.eq.s32.totalorder %s23, 1
      %p121 = por %p119, %p120
      %p123 = scmp.ne.s32.totalorder %s108, %s122
      %p124 = scmp.eq.s32.totalorder %s23, 0
      %p125 = por %p123, %p124
      %s126 = ssub.s32 %s24, %s36
      %p127 = scmp.eq.s32.totalorder %s126, 0
      %s129 = sadd.s32 %s128, 1
      %s130 = scalar_select %p127, %s128, %s129
      %p133 = pneg %p127
      %p134 = scmp.eq.s32.totalorder %s17, 1
      %p135 = por %p133, %p134
      %p136 = scmp.ne.s32.totalorder %s128, %s131
      %p137 = scmp.eq.s32.totalorder %s17, 0
      %p138 = por %p136, %p137
      %p139 = scmp.ne.s32.totalorder %s128, %s131
      %p140 = scmp.eq.s32.totalorder %s22, 1
      %p141 = por %p139, %p140
      %p142 = scmp.ne.s32.totalorder %s131, %s132
      %p143 = scmp.eq.s32.totalorder %s22, 0
      %p144 = por %p142, %p143
      %p145 = scmp.ne.s32.totalorder %s131, %s132
      %p146 = scmp.eq.s32.totalorder %s23, 1
      %p147 = por %p145, %p146
      %p149 = scmp.ne.s32.totalorder %s132, %s148
      %p150 = scmp.eq.s32.totalorder %s23, 0
      %p151 = por %p149, %p150
      %p152 = scmp.le.s32.totalorder 1, %s17
      %p153 = scmp.lt.s32.totalorder %s17, 3
      %p154 = pnand %p152, %p153
      %p155 = pneg %p154
      // Predicated region
      $region9: #{tpu_custom_call.1} parent=5 // pred_check
        _
      $region10: #{tpu_custom_call.1} parent=5 // pred_check_branch
        %157 = sbr.rel (%p154) target = $region12
      $region11: #{tpu_custom_call.1} parent=5 // pred_region
        %s158 = ssub.s32 %s17, 1
        // Predicated region
        $region13: #{tpu_custom_call.1} parent=11 // pred_check
          %p159 = pneg %p76
        $region14: #{tpu_custom_call.1} parent=11 // pred_check_branch
          %161 = sbr.rel (%p159) target = $region16
        $region15: #{tpu_custom_call.1} parent=11 // pred_region
          %163 = vsyncadd [#allocation6], 0
          %s164 = sshll.u32 %s1, 4
          %s165 = int_to_ptr.hbm [resolvable:$true] %s164
          %s166 = sshll.u32 [#allocation5], 4
          %s167 = int_to_ptr.vmem [resolvable:$true] %s166
          %172 = dma.hbm_to_vmem [thread:$0]  %s165, 6144, %s167, [#allocation6], 384, 384, 24
        $region16: #{tpu_custom_call.1} parent=11 // pred_fallthru
          _
        // Predicated region
        $region17: #{tpu_custom_call.1} parent=11 // pred_check
          %p173 = pneg %p97
        $region18: #{tpu_custom_call.1} parent=11 // pred_check_branch
          %175 = sbr.rel (%p173) target = $region20
        $region19: #{tpu_custom_call.1} parent=11 // pred_region
          %177 = vsyncadd [#allocation6], 0
          %s178 = sshll.u32 %s2, 4
          %s179 = int_to_ptr.hbm [resolvable:$true] %s178
          %s180 = sshll.u32 [#allocation7], 4
          %s181 = int_to_ptr.vmem [resolvable:$true] %s180
          %186 = dma.hbm_to_vmem [thread:$0]  %s179, 2048, %s181, [#allocation6], 128, 128, 8
        $region20: #{tpu_custom_call.1} parent=11 // pred_fallthru
          _
        // Predicated region
        $region21: #{tpu_custom_call.1} parent=11 // pred_check
          %p187 = pneg %p118
        $region22: #{tpu_custom_call.1} parent=11 // pred_check_branch
          %189 = sbr.rel (%p187) target = $region24
        $region23: #{tpu_custom_call.1} parent=11 // pred_region
          _
        $region24: #{tpu_custom_call.1} parent=11 // pred_fallthru
          _
      $region12: #{tpu_custom_call.1} parent=5 // pred_fallthru
        _
      %p190 = scmp.lt.s32.totalorder %s17, 2
      // Predicated region
      $region25: #{tpu_custom_call.1} parent=5 // pred_check
        %p191 = pneg %p190
      $region26: #{tpu_custom_call.1} parent=5 // pred_check_branch
        %193 = sbr.rel (%p191) target = $region28
      $region27: #{tpu_custom_call.1} parent=5 // pred_region
        // Predicated region
        $region29: #{tpu_custom_call.1} parent=27 // pred_check
          %p194 = pneg %p49
        $region30: #{tpu_custom_call.1} parent=27 // pred_check_branch
          %196 = sbr.rel (%p194) target = $region32
        $region31: #{tpu_custom_call.1} parent=27 // pred_region
          %s197 = sand.u32 %s39, 1
          %s198 = scalar_lea.sflag [#allocation3], %s197
          %s199 = sand.u32 %s39, 1
          %s200 = smul.addr %s199, 128
          %s201 = scalar_lea.vmem [#allocation2], %s200
          %203 = vsyncadd %s198, 0
          %s204 = smul.addr %s24, 16
          %s205 = smul.addr %s204, 8
          %s206 = scalar_lea.hbm %s0, %s205
          %s207 = sshll.u32 %s206, 4
          %s208 = int_to_ptr.hbm [resolvable:$true] %s207
          %s209 = sshll.u32 %s201, 4
          %s210 = int_to_ptr.vmem [resolvable:$true] %s209
          %215 = dma.hbm_to_vmem [thread:$0]  %s208, 2048, %s210, %s198, 128, 128, 8
        $region32: #{tpu_custom_call.1} parent=27 // pred_fallthru
          _
      $region28: #{tpu_custom_call.1} parent=5 // pred_fallthru
        _
      %p216 = scmp.le.s32.totalorder 1, %s17
      %p217 = scmp.lt.s32.totalorder %s17, 3
      %p218 = pnand %p216, %p217
      %p219 = pneg %p218
      // Predicated region
      $region33: #{tpu_custom_call.1} parent=5 // pred_check
        _
      $region34: #{tpu_custom_call.1} parent=5 // pred_check_branch
        %221 = sbr.rel (%p218) target = $region36
      $region35: #{tpu_custom_call.1} parent=5 // pred_region
        %s222 = ssub.s32 %s17, 1
        %s223 = sand.u32 %s42, 1
        %s224 = scalar_lea.sflag [#allocation3], %s223
        %s225 = sand.u32 %s42, 1
        %s226 = smul.addr %s225, 128
        %s227 = scalar_lea.vmem [#allocation2], %s226
        // Predicated region
        $region37: #{tpu_custom_call.1} parent=35 // pred_check
          %p228 = pneg %p55
        $region38: #{tpu_custom_call.1} parent=35 // pred_check_branch
          %230 = sbr.rel (%p228) target = $region40
        $region39: #{tpu_custom_call.1} parent=35 // pred_region
          %232 = dma.done %s224, 2048
        $region40: #{tpu_custom_call.1} parent=35 // pred_fallthru
          _
        // Predicated region
        $region41: #{tpu_custom_call.1} parent=35 // pred_check
          %p233 = pneg %p76
        $region42: #{tpu_custom_call.1} parent=35 // pred_check_branch
          %235 = sbr.rel (%p233) target = $region44
        $region43: #{tpu_custom_call.1} parent=35 // pred_region
          %237 = dma.done [#allocation6], 6144
        $region44: #{tpu_custom_call.1} parent=35 // pred_fallthru
          _
        // Predicated region
        $region45: #{tpu_custom_call.1} parent=35 // pred_check
          %p238 = pneg %p97
        $region46: #{tpu_custom_call.1} parent=35 // pred_check_branch
          %240 = sbr.rel (%p238) target = $region48
        $region47: #{tpu_custom_call.1} parent=35 // pred_region
          %242 = dma.done [#allocation6], 2048
        $region48: #{tpu_custom_call.1} parent=35 // pred_fallthru
          _
        %s243 = sand.u32 %s42, 1
        %s244 = scalar_lea.sflag [#allocation3], %s243
        %s245 = sand.u32 %s42, 1
        %s246 = smul.addr %s245, 128
        %s247 = scalar_lea.vmem [#allocation2], %s246
        %p248 = pneg %p55
        %p249 = pneg %p52
        %p250 = pneg %p76
        %p251 = pneg %p73
        %p252 = pneg %p97
        %p253 = pneg %p94
        %p254 = pneg %p118
        %p255 = pneg %p115
        %p256 = pneg %p144
        %p257 = pneg %p141
        %s258 = sand.u32 %s131, 1
        %s259 = scalar_lea.sflag [#allocation4], %s258
        %s260 = sand.u32 %s131, 1
        %s261 = smul.addr %s260, 128
        %s262 = scalar_lea.vmem [#allocation8], %s261
        %v263 = vld [vmem:[%s227] sm:$0xff]
        %v264 = vld [vmem:[%s227 + $0x8] sm:$0xff]
        %v265 = vld [vmem:[%s227 + $0x10] sm:$0xff]
        %v266 = vld [vmem:[%s227 + $0x18] sm:$0xff]
        %v267 = vld [vmem:[%s227 + $0x20] sm:$0xff]
        %v268 = vld [vmem:[%s227 + $0x28] sm:$0xff]
        %v269 = vld [vmem:[%s227 + $0x30] sm:$0xff]
        %v270 = vld [vmem:[%s227 + $0x38] sm:$0xff]
        %v271 = vld [vmem:[%s227 + $0x40] sm:$0xff]
        %v272 = vld [vmem:[%s227 + $0x48] sm:$0xff]
        %v273 = vld [vmem:[%s227 + $0x50] sm:$0xff]
        %v274 = vld [vmem:[%s227 + $0x58] sm:$0xff]
        %v275 = vld [vmem:[%s227 + $0x60] sm:$0xff]
        %v276 = vld [vmem:[%s227 + $0x68] sm:$0xff]
        %v277 = vld [vmem:[%s227 + $0x70] sm:$0xff]
        %v278 = vld [vmem:[%s227 + $0x78] sm:$0xff]
        %s279 = smul.u32 %s27, 48
        %s280 = smul.addr %s279, 8
        %s281 = scalar_lea.vmem [#allocation5], %s280
        %v282 = vld [vmem:[%s281] sm:$0xff]
        %v283 = vld [vmem:[%s281 + $0x8] sm:$0xff]
        %v284 = vld [vmem:[%s281 + $0x10] sm:$0xff]
        %v285 = vld [vmem:[%s281 + $0x18] sm:$0xff]
        %v286 = vld [vmem:[%s281 + $0x20] sm:$0xff]
        %v287 = vld [vmem:[%s281 + $0x28] sm:$0xff]
        %v288 = vld [vmem:[%s281 + $0x30] sm:$0xff]
        %v289 = vld [vmem:[%s281 + $0x38] sm:$0xff]
        %v290 = vld [vmem:[%s281 + $0x40] sm:$0xff]
        %v291 = vld [vmem:[%s281 + $0x48] sm:$0xff]
        %v292 = vld [vmem:[%s281 + $0x50] sm:$0xff]
        %v293 = vld [vmem:[%s281 + $0x58] sm:$0xff]
        %v294 = vld [vmem:[%s281 + $0x60] sm:$0xff]
        %v295 = vld [vmem:[%s281 + $0x68] sm:$0xff]
        %v296 = vld [vmem:[%s281 + $0x70] sm:$0xff]
        %v297 = vld [vmem:[%s281 + $0x78] sm:$0xff]
        %v298 = vld [vmem:[%s281 + $0x80] sm:$0xff]
        %v299 = vld [vmem:[%s281 + $0x88] sm:$0xff]
        %v300 = vld [vmem:[%s281 + $0x90] sm:$0xff]
        %v301 = vld [vmem:[%s281 + $0x98] sm:$0xff]
        %v302 = vld [vmem:[%s281 + $0xa0] sm:$0xff]
        %v303 = vld [vmem:[%s281 + $0xa8] sm:$0xff]
        %v304 = vld [vmem:[%s281 + $0xb0] sm:$0xff]
        %v305 = vld [vmem:[%s281 + $0xb8] sm:$0xff]
        %v306 = vld [vmem:[%s281 + $0xc0] sm:$0xff]
        %v307 = vld [vmem:[%s281 + $0xc8] sm:$0xff]
        %v308 = vld [vmem:[%s281 + $0xd0] sm:$0xff]
        %v309 = vld [vmem:[%s281 + $0xd8] sm:$0xff]
        %v310 = vld [vmem:[%s281 + $0xe0] sm:$0xff]
        %v311 = vld [vmem:[%s281 + $0xe8] sm:$0xff]
        %v312 = vld [vmem:[%s281 + $0xf0] sm:$0xff]
        %v313 = vld [vmem:[%s281 + $0xf8] sm:$0xff]
        %v314 = vld [vmem:[%s281 + $0x100] sm:$0xff]
        %v315 = vld [vmem:[%s281 + $0x108] sm:$0xff]
        %v316 = vld [vmem:[%s281 + $0x110] sm:$0xff]
        %v317 = vld [vmem:[%s281 + $0x118] sm:$0xff]
        %v318 = vld [vmem:[%s281 + $0x120] sm:$0xff]
        %v319 = vld [vmem:[%s281 + $0x128] sm:$0xff]
        %v320 = vld [vmem:[%s281 + $0x130] sm:$0xff]
        %v321 = vld [vmem:[%s281 + $0x138] sm:$0xff]
        %v322 = vld [vmem:[%s281 + $0x140] sm:$0xff]
        %v323 = vld [vmem:[%s281 + $0x148] sm:$0xff]
        %v324 = vld [vmem:[%s281 + $0x150] sm:$0xff]
        %v325 = vld [vmem:[%s281 + $0x158] sm:$0xff]
        %v326 = vld [vmem:[%s281 + $0x160] sm:$0xff]
        %v327 = vld [vmem:[%s281 + $0x168] sm:$0xff]
        %v328 = vld [vmem:[%s281 + $0x170] sm:$0xff]
        %v329 = vld [vmem:[%s281 + $0x178] sm:$0xff]
        %330 = vmatpush.msra.mxu0 %v327
        %331 = vmatpush.msra.mxu0 %v324
        %332 = vmatpush.msra.mxu0 %v321
        %333 = vmatpush.msra.mxu0 %v318
        %334 = vmatpush.msra.mxu0 %v315
        %335 = vmatpush.msra.mxu0 %v312
        %336 = vmatpush.msra.mxu0 %v309
        %337 = vmatpush.msra.mxu0 %v306
        %338 = vmatpush.msra.mxu0 %v303
        %339 = vmatpush.msra.mxu0 %v300
        %340 = vmatpush.msra.mxu0 %v297
        %341 = vmatpush.msra.mxu0 %v294
        %342 = vmatpush.msra.mxu0 %v291
        %343 = vmatpush.msra.mxu0 %v288
        %344 = vmatpush.msra.mxu0 %v285
        %345 = vmatpush.msra.mxu0 %v282
        %346 = vmatmul.f32.gmra.mxu0 %v263
        %v347 = vpop.f32.mrf.mxu0
        %v348 = vadd.f32 0.0, %v347
        %349 = vmatmul.f32.gmra.mxu0 %v264
        %v350 = vpop.f32.mrf.mxu0
        %v351 = vadd.f32 0.0, %v350
        %352 = vmatmul.f32.gmra.mxu0 %v265
        %v353 = vpop.f32.mrf.mxu0
        %v354 = vadd.f32 0.0, %v353
        %355 = vmatmul.f32.gmra.mxu0 %v266
        %v356 = vpop.f32.mrf.mxu0
        %v357 = vadd.f32 0.0, %v356
        %358 = vmatmul.f32.gmra.mxu0 %v267
        %v359 = vpop.f32.mrf.mxu0
        %v360 = vadd.f32 0.0, %v359
        %361 = vmatmul.f32.gmra.mxu0 %v268
        %v362 = vpop.f32.mrf.mxu0
        %v363 = vadd.f32 0.0, %v362
        %364 = vmatmul.f32.gmra.mxu0 %v269
        %v365 = vpop.f32.mrf.mxu0
        %v366 = vadd.f32 0.0, %v365
        %367 = vmatmul.f32.gmra.mxu0 %v270
        %v368 = vpop.f32.mrf.mxu0
        %v369 = vadd.f32 0.0, %v368
        %370 = vmatmul.f32.gmra.mxu0 %v271
        %v371 = vpop.f32.mrf.mxu0
        %v372 = vadd.f32 0.0, %v371
        %373 = vmatmul.f32.gmra.mxu0 %v272
        %v374 = vpop.f32.mrf.mxu0
        %v375 = vadd.f32 0.0, %v374
        %376 = vmatmul.f32.gmra.mxu0 %v273
        %v377 = vpop.f32.mrf.mxu0
        %v378 = vadd.f32 0.0, %v377
        %379 = vmatmul.f32.gmra.mxu0 %v274
        %v380 = vpop.f32.mrf.mxu0
        %v381 = vadd.f32 0.0, %v380
        %382 = vmatmul.f32.gmra.mxu0 %v275
        %v383 = vpop.f32.mrf.mxu0
        %v384 = vadd.f32 0.0, %v383
        %385 = vmatmul.f32.gmra.mxu0 %v276
        %v386 = vpop.f32.mrf.mxu0
        %v387 = vadd.f32 0.0, %v386
        %388 = vmatmul.f32.gmra.mxu0 %v277
        %v389 = vpop.f32.mrf.mxu0
        %v390 = vadd.f32 0.0, %v389
        %391 = vmatmul.f32.gmra.mxu0 %v278
        %v392 = vpop.f32.mrf.mxu0
        %v393 = vadd.f32 0.0, %v392
        %394 = vdwg.mxu0
        %395 = vmatpush.msra.mxu0 %v328
        %396 = vmatpush.msra.mxu0 %v325
        %397 = vmatpush.msra.mxu0 %v322
        %398 = vmatpush.msra.mxu0 %v319
        %399 = vmatpush.msra.mxu0 %v316
        %400 = vmatpush.msra.mxu0 %v313
        %401 = vmatpush.msra.mxu0 %v310
        %402 = vmatpush.msra.mxu0 %v307
        %403 = vmatpush.msra.mxu0 %v304
        %404 = vmatpush.msra.mxu0 %v301
        %405 = vmatpush.msra.mxu0 %v298
        %406 = vmatpush.msra.mxu0 %v295
        %407 = vmatpush.msra.mxu0 %v292
        %408 = vmatpush.msra.mxu0 %v289
        %409 = vmatpush.msra.mxu0 %v286
        %410 = vmatpush.msra.mxu0 %v283
        %411 = vmatmul.f32.gmra.mxu0 %v263
        %v412 = vpop.f32.mrf.mxu0
        %v413 = vadd.f32 0.0, %v412
        %414 = vmatmul.f32.gmra.mxu0 %v264
        %v415 = vpop.f32.mrf.mxu0
        %v416 = vadd.f32 0.0, %v415
        %417 = vmatmul.f32.gmra.mxu0 %v265
        %v418 = vpop.f32.mrf.mxu0
        %v419 = vadd.f32 0.0, %v418
        %420 = vmatmul.f32.gmra.mxu0 %v266
        %v421 = vpop.f32.mrf.mxu0
        %v422 = vadd.f32 0.0, %v421
        %423 = vmatmul.f32.gmra.mxu0 %v267
        %v424 = vpop.f32.mrf.mxu0
        %v425 = vadd.f32 0.0, %v424
        %426 = vmatmul.f32.gmra.mxu0 %v268
        %v427 = vpop.f32.mrf.mxu0
        %v428 = vadd.f32 0.0, %v427
        %429 = vmatmul.f32.gmra.mxu0 %v269
        %v430 = vpop.f32.mrf.mxu0
        %v431 = vadd.f32 0.0, %v430
        %432 = vmatmul.f32.gmra.mxu0 %v270
        %v433 = vpop.f32.mrf.mxu0
        %v434 = vadd.f32 0.0, %v433
        %435 = vmatmul.f32.gmra.mxu0 %v271
        %v436 = vpop.f32.mrf.mxu0
        %v437 = vadd.f32 0.0, %v436
        %438 = vmatmul.f32.gmra.mxu0 %v272
        %v439 = vpop.f32.mrf.mxu0
        %v440 = vadd.f32 0.0, %v439
        %441 = vmatmul.f32.gmra.mxu0 %v273
        %v442 = vpop.f32.mrf.mxu0
        %v443 = vadd.f32 0.0, %v442
        %444 = vmatmul.f32.gmra.mxu0 %v274
        %v445 = vpop.f32.mrf.mxu0
        %v446 = vadd.f32 0.0, %v445
        %447 = vmatmul.f32.gmra.mxu0 %v275
        %v448 = vpop.f32.mrf.mxu0
        %v449 = vadd.f32 0.0, %v448
        %450 = vmatmul.f32.gmra.mxu0 %v276
        %v451 = vpop.f32.mrf.mxu0
        %v452 = vadd.f32 0.0, %v451
        %453 = vmatmul.f32.gmra.mxu0 %v277
        %v454 = vpop.f32.mrf.mxu0
        %v455 = vadd.f32 0.0, %v454
        %456 = vmatmul.f32.gmra.mxu0 %v278
        %v457 = vpop.f32.mrf.mxu0
        %v458 = vadd.f32 0.0, %v457
        %459 = vdwg.mxu0
        %460 = vmatpush.msra.mxu0 %v329
        %461 = vmatpush.msra.mxu0 %v326
        %462 = vmatpush.msra.mxu0 %v323
        %463 = vmatpush.msra.mxu0 %v320
        %464 = vmatpush.msra.mxu0 %v317
        %465 = vmatpush.msra.mxu0 %v314
        %466 = vmatpush.msra.mxu0 %v311
        %467 = vmatpush.msra.mxu0 %v308
        %468 = vmatpush.msra.mxu0 %v305
        %469 = vmatpush.msra.mxu0 %v302
        %470 = vmatpush.msra.mxu0 %v299
        %471 = vmatpush.msra.mxu0 %v296
        %472 = vmatpush.msra.mxu0 %v293
        %473 = vmatpush.msra.mxu0 %v290
        %474 = vmatpush.msra.mxu0 %v287
        %475 = vmatpush.msra.mxu0 %v284
        %476 = vmatmul.f32.gmra.mxu0 %v263
        %v477 = vpop.f32.mrf.mxu0
        %v478 = vadd.f32 0.0, %v477
        %479 = vmatmul.f32.gmra.mxu0 %v264
        %v480 = vpop.f32.mrf.mxu0
        %v481 = vadd.f32 0.0, %v480
        %482 = vmatmul.f32.gmra.mxu0 %v265
        %v483 = vpop.f32.mrf.mxu0
        %v484 = vadd.f32 0.0, %v483
        %485 = vmatmul.f32.gmra.mxu0 %v266
        %v486 = vpop.f32.mrf.mxu0
        %v487 = vadd.f32 0.0, %v486
        %488 = vmatmul.f32.gmra.mxu0 %v267
        %v489 = vpop.f32.mrf.mxu0
        %v490 = vadd.f32 0.0, %v489
        %491 = vmatmul.f32.gmra.mxu0 %v268
        %v492 = vpop.f32.mrf.mxu0
        %v493 = vadd.f32 0.0, %v492
        %494 = vmatmul.f32.gmra.mxu0 %v269
        %v495 = vpop.f32.mrf.mxu0
        %v496 = vadd.f32 0.0, %v495
        %497 = vmatmul.f32.gmra.mxu0 %v270
        %v498 = vpop.f32.mrf.mxu0
        %v499 = vadd.f32 0.0, %v498
        %500 = vmatmul.f32.gmra.mxu0 %v271
        %v501 = vpop.f32.mrf.mxu0
        %v502 = vadd.f32 0.0, %v501
        %503 = vmatmul.f32.gmra.mxu0 %v272
        %v504 = vpop.f32.mrf.mxu0
        %v505 = vadd.f32 0.0, %v504
        %506 = vmatmul.f32.gmra.mxu0 %v273
        %v507 = vpop.f32.mrf.mxu0
        %v508 = vadd.f32 0.0, %v507
        %509 = vmatmul.f32.gmra.mxu0 %v274
        %v510 = vpop.f32.mrf.mxu0
        %v511 = vadd.f32 0.0, %v510
        %512 = vmatmul.f32.gmra.mxu0 %v275
        %v513 = vpop.f32.mrf.mxu0
        %v514 = vadd.f32 0.0, %v513
        %515 = vmatmul.f32.gmra.mxu0 %v276
        %v516 = vpop.f32.mrf.mxu0
        %v517 = vadd.f32 0.0, %v516
        %518 = vmatmul.f32.gmra.mxu0 %v277
        %v519 = vpop.f32.mrf.mxu0
        %v520 = vadd.f32 0.0, %v519
        %521 = vmatmul.f32.gmra.mxu0 %v278
        %v522 = vpop.f32.mrf.mxu0
        %v523 = vadd.f32 0.0, %v522
        %524 = vdwg.mxu0
        %vm525 = vcmask 523264
        %v527 = vsel %vm525, %v348, 0
        %v530 = vsel %vm525, %v351, 0
        %v533 = vsel %vm525, %v354, 0
        %v536 = vsel %vm525, %v357, 0
        %v539 = vsel %vm525, %v360, 0
        %v542 = vsel %vm525, %v363, 0
        %v545 = vsel %vm525, %v366, 0
        %v548 = vsel %vm525, %v369, 0
        %v551 = vsel %vm525, %v372, 0
        %v554 = vsel %vm525, %v375, 0
        %v557 = vsel %vm525, %v378, 0
        %v560 = vsel %vm525, %v381, 0
        %v563 = vsel %vm525, %v384, 0
        %v566 = vsel %vm525, %v387, 0
        %v569 = vsel %vm525, %v390, 0
        %v572 = vsel %vm525, %v393, 0
        %v575 = vsel %vm525, %v413, 0
        %v578 = vsel %vm525, %v416, 0
        %v581 = vsel %vm525, %v419, 0
        %v584 = vsel %vm525, %v422, 0
        %v587 = vsel %vm525, %v425, 0
        %v590 = vsel %vm525, %v428, 0
        %v593 = vsel %vm525, %v431, 0
        %v596 = vsel %vm525, %v434, 0
        %v599 = vsel %vm525, %v437, 0
        %v602 = vsel %vm525, %v440, 0
        %v605 = vsel %vm525, %v443, 0
        %v608 = vsel %vm525, %v446, 0
        %v611 = vsel %vm525, %v449, 0
        %v614 = vsel %vm525, %v452, 0
        %v617 = vsel %vm525, %v455, 0
        %v620 = vsel %vm525, %v458, 0
        %622 = vmatpush.xpose.msra.mxu0 %v620
        %623 = vmatpush.xpose.msra.mxu0 %v617
        %624 = vmatpush.xpose.msra.mxu0 %v614
        %625 = vmatpush.xpose.msra.mxu0 %v611
        %626 = vmatpush.xpose.msra.mxu0 %v608
        %627 = vmatpush.xpose.msra.mxu0 %v605
        %628 = vmatpush.xpose.msra.mxu0 %v602
        %629 = vmatpush.xpose.msra.mxu0 %v599
        %630 = vmatpush.xpose.msra.mxu0 %v596
        %631 = vmatpush.xpose.msra.mxu0 %v593
        %632 = vmatpush.xpose.msra.mxu0 %v590
        %633 = vmatpush.xpose.msra.mxu0 %v587
        %634 = vmatpush.xpose.msra.mxu0 %v584
        %635 = vmatpush.xpose.msra.mxu0 %v581
        %636 = vmatpush.xpose.msra.mxu0 %v578
        %637 = vmatpush.xpose.msra.mxu0 %v575
        %638 = vmatmul.f32.gmra.mxu0 %v527
        %v639 = vpop.f32.mrf.mxu0
        %v640 = vadd.f32 0.0, %v639
        %641 = vmatmul.f32.gmra.mxu0 %v530
        %v642 = vpop.f32.mrf.mxu0
        %v643 = vadd.f32 0.0, %v642
        %644 = vmatmul.f32.gmra.mxu0 %v533
        %v645 = vpop.f32.mrf.mxu0
        %v646 = vadd.f32 0.0, %v645
        %647 = vmatmul.f32.gmra.mxu0 %v536
        %v648 = vpop.f32.mrf.mxu0
        %v649 = vadd.f32 0.0, %v648
        %650 = vmatmul.f32.gmra.mxu0 %v539
        %v651 = vpop.f32.mrf.mxu0
        %v652 = vadd.f32 0.0, %v651
        %653 = vmatmul.f32.gmra.mxu0 %v542
        %v654 = vpop.f32.mrf.mxu0
        %v655 = vadd.f32 0.0, %v654
        %656 = vmatmul.f32.gmra.mxu0 %v545
        %v657 = vpop.f32.mrf.mxu0
        %v658 = vadd.f32 0.0, %v657
        %659 = vmatmul.f32.gmra.mxu0 %v548
        %v660 = vpop.f32.mrf.mxu0
        %v661 = vadd.f32 0.0, %v660
        %662 = vmatmul.f32.gmra.mxu0 %v551
        %v663 = vpop.f32.mrf.mxu0
        %v664 = vadd.f32 0.0, %v663
        %665 = vmatmul.f32.gmra.mxu0 %v554
        %v666 = vpop.f32.mrf.mxu0
        %v667 = vadd.f32 0.0, %v666
        %668 = vmatmul.f32.gmra.mxu0 %v557
        %v669 = vpop.f32.mrf.mxu0
        %v670 = vadd.f32 0.0, %v669
        %671 = vmatmul.f32.gmra.mxu0 %v560
        %v672 = vpop.f32.mrf.mxu0
        %v673 = vadd.f32 0.0, %v672
        %674 = vmatmul.f32.gmra.mxu0 %v563
        %v675 = vpop.f32.mrf.mxu0
        %v676 = vadd.f32 0.0, %v675
        %677 = vmatmul.f32.gmra.mxu0 %v566
        %v678 = vpop.f32.mrf.mxu0
        %v679 = vadd.f32 0.0, %v678
        %680 = vmatmul.f32.gmra.mxu0 %v569
        %v681 = vpop.f32.mrf.mxu0
        %v682 = vadd.f32 0.0, %v681
        %683 = vmatmul.f32.gmra.mxu0 %v572
        %v684 = vpop.f32.mrf.mxu0
        %v685 = vadd.f32 0.0, %v684
        %686 = vdwg.mxu0
        %687 = vmax.xlane.f32.xlu0 %v640
        %v688 = vpop.xlane.xlu0 %687
        %689 = vmax.xlane.f32.xlu0 %v643
        %v690 = vpop.xlane.xlu0 %689
        %691 = vmax.xlane.f32.xlu0 %v646
        %v692 = vpop.xlane.xlu0 %691
        %693 = vmax.xlane.f32.xlu0 %v649
        %v694 = vpop.xlane.xlu0 %693
        %695 = vmax.xlane.f32.xlu0 %v652
        %v696 = vpop.xlane.xlu0 %695
        %697 = vmax.xlane.f32.xlu0 %v655
        %v698 = vpop.xlane.xlu0 %697
        %699 = vmax.xlane.f32.xlu0 %v658
        %v700 = vpop.xlane.xlu0 %699
        %701 = vmax.xlane.f32.xlu0 %v661
        %v702 = vpop.xlane.xlu0 %701
        %703 = vmax.xlane.f32.xlu0 %v664
        %v704 = vpop.xlane.xlu0 %703
        %705 = vmax.xlane.f32.xlu0 %v667
        %v706 = vpop.xlane.xlu0 %705
        %707 = vmax.xlane.f32.xlu0 %v670
        %v708 = vpop.xlane.xlu0 %707
        %709 = vmax.xlane.f32.xlu0 %v673
        %v710 = vpop.xlane.xlu0 %709
        %711 = vmax.xlane.f32.xlu0 %v676
        %v712 = vpop.xlane.xlu0 %711
        %713 = vmax.xlane.f32.xlu0 %v679
        %v714 = vpop.xlane.xlu0 %713
        %715 = vmax.xlane.f32.xlu0 %v682
        %v716 = vpop.xlane.xlu0 %715
        %717 = vmax.xlane.f32.xlu0 %v685
        %v718 = vpop.xlane.xlu0 %717
        %v719 = vsub.f32 %v640, %v688
        %v720 = vsub.f32 %v643, %v690
        %v721 = vsub.f32 %v646, %v692
        %v722 = vsub.f32 %v649, %v694
        %v723 = vsub.f32 %v652, %v696
        %v724 = vsub.f32 %v655, %v698
        %v725 = vsub.f32 %v658, %v700
        %v726 = vsub.f32 %v661, %v702
        %v727 = vsub.f32 %v664, %v704
        %v728 = vsub.f32 %v667, %v706
        %v729 = vsub.f32 %v670, %v708
        %v730 = vsub.f32 %v673, %v710
        %v731 = vsub.f32 %v676, %v712
        %v732 = vsub.f32 %v679, %v714
        %v733 = vsub.f32 %v682, %v716
        %v734 = vsub.f32 %v685, %v718
        %v735 = vmul.f32 %v719, 1.442695
        %v736 = vpow.pop %v735
        %v737 = vmul.f32 %v720, 1.442695
        %v738 = vpow.pop %v737
        %v739 = vmul.f32 %v721, 1.442695
        %v740 = vpow.pop %v739
        %v741 = vmul.f32 %v722, 1.442695
        %v742 = vpow.pop %v741
        %v743 = vmul.f32 %v723, 1.442695
        %v744 = vpow.pop %v743
        %v745 = vmul.f32 %v724, 1.442695
        %v746 = vpow.pop %v745
        %v747 = vmul.f32 %v725, 1.442695
        %v748 = vpow.pop %v747
        %v749 = vmul.f32 %v726, 1.442695
        %v750 = vpow.pop %v749
        %v751 = vmul.f32 %v727, 1.442695
        %v752 = vpow.pop %v751
        %v753 = vmul.f32 %v728, 1.442695
        %v754 = vpow.pop %v753
        %v755 = vmul.f32 %v729, 1.442695
        %v756 = vpow.pop %v755
        %v757 = vmul.f32 %v730, 1.442695
        %v758 = vpow.pop %v757
        %v759 = vmul.f32 %v731, 1.442695
        %v760 = vpow.pop %v759
        %v761 = vmul.f32 %v732, 1.442695
        %v762 = vpow.pop %v761
        %v763 = vmul.f32 %v733, 1.442695
        %v764 = vpow.pop %v763
        %v765 = vmul.f32 %v734, 1.442695
        %v766 = vpow.pop %v765
        %767 = vadd.xlane.f32.xlu0 %v736
        %v768 = vpop.xlane.xlu0 %767
        %769 = vadd.xlane.f32.xlu0 %v738
        %v770 = vpop.xlane.xlu0 %769
        %771 = vadd.xlane.f32.xlu0 %v740
        %v772 = vpop.xlane.xlu0 %771
        %773 = vadd.xlane.f32.xlu0 %v742
        %v774 = vpop.xlane.xlu0 %773
        %775 = vadd.xlane.f32.xlu0 %v744
        %v776 = vpop.xlane.xlu0 %775
        %777 = vadd.xlane.f32.xlu0 %v746
        %v778 = vpop.xlane.xlu0 %777
        %779 = vadd.xlane.f32.xlu0 %v748
        %v780 = vpop.xlane.xlu0 %779
        %781 = vadd.xlane.f32.xlu0 %v750
        %v782 = vpop.xlane.xlu0 %781
        %783 = vadd.xlane.f32.xlu0 %v752
        %v784 = vpop.xlane.xlu0 %783
        %785 = vadd.xlane.f32.xlu0 %v754
        %v786 = vpop.xlane.xlu0 %785
        %787 = vadd.xlane.f32.xlu0 %v756
        %v788 = vpop.xlane.xlu0 %787
        %789 = vadd.xlane.f32.xlu0 %v758
        %v790 = vpop.xlane.xlu0 %789
        %791 = vadd.xlane.f32.xlu0 %v760
        %v792 = vpop.xlane.xlu0 %791
        %793 = vadd.xlane.f32.xlu0 %v762
        %v794 = vpop.xlane.xlu0 %793
        %795 = vadd.xlane.f32.xlu0 %v764
        %v796 = vpop.xlane.xlu0 %795
        %797 = vadd.xlane.f32.xlu0 %v766
        %v798 = vpop.xlane.xlu0 %797
        %v799 = vrcp.pop %v768
        %v800 = vrcp.pop %v770
        %v801 = vrcp.pop %v772
        %v802 = vrcp.pop %v774
        %v803 = vrcp.pop %v776
        %v804 = vrcp.pop %v778
        %v805 = vrcp.pop %v780
        %v806 = vrcp.pop %v782
        %v807 = vrcp.pop %v784
        %v808 = vrcp.pop %v786
        %v809 = vrcp.pop %v788
        %v810 = vrcp.pop %v790
        %v811 = vrcp.pop %v792
        %v812 = vrcp.pop %v794
        %v813 = vrcp.pop %v796
        %v814 = vrcp.pop %v798
        %v815 = vmul.f32 %v736, %v799
        %v816 = vmul.f32 %v738, %v800
        %v817 = vmul.f32 %v740, %v801
        %v818 = vmul.f32 %v742, %v802
        %v819 = vmul.f32 %v744, %v803
        %v820 = vmul.f32 %v746, %v804
        %v821 = vmul.f32 %v748, %v805
        %v822 = vmul.f32 %v750, %v806
        %v823 = vmul.f32 %v752, %v807
        %v824 = vmul.f32 %v754, %v808
        %v825 = vmul.f32 %v756, %v809
        %v826 = vmul.f32 %v758, %v810
        %v827 = vmul.f32 %v760, %v811
        %v828 = vmul.f32 %v762, %v812
        %v829 = vmul.f32 %v764, %v813
        %v830 = vmul.f32 %v766, %v814
        %831 = vmatpush.msra.mxu0 %v523
        %832 = vmatpush.msra.mxu0 %v520
        %833 = vmatpush.msra.mxu0 %v517
        %834 = vmatpush.msra.mxu0 %v514
        %835 = vmatpush.msra.mxu0 %v511
        %836 = vmatpush.msra.mxu0 %v508
        %837 = vmatpush.msra.mxu0 %v505
        %838 = vmatpush.msra.mxu0 %v502
        %839 = vmatpush.msra.mxu0 %v499
        %840 = vmatpush.msra.mxu0 %v496
        %841 = vmatpush.msra.mxu0 %v493
        %842 = vmatpush.msra.mxu0 %v490
        %843 = vmatpush.msra.mxu0 %v487
        %844 = vmatpush.msra.mxu0 %v484
        %845 = vmatpush.msra.mxu0 %v481
        %846 = vmatpush.msra.mxu0 %v478
        %847 = vmatmul.f32.gmra.mxu0 %v815
        %v848 = vpop.f32.mrf.mxu0
        %v849 = vadd.f32 0.0, %v848
        %850 = vmatmul.f32.gmra.mxu0 %v816
        %v851 = vpop.f32.mrf.mxu0
        %v852 = vadd.f32 0.0, %v851
        %853 = vmatmul.f32.gmra.mxu0 %v817
        %v854 = vpop.f32.mrf.mxu0
        %v855 = vadd.f32 0.0, %v854
        %856 = vmatmul.f32.gmra.mxu0 %v818
        %v857 = vpop.f32.mrf.mxu0
        %v858 = vadd.f32 0.0, %v857
        %859 = vmatmul.f32.gmra.mxu0 %v819
        %v860 = vpop.f32.mrf.mxu0
        %v861 = vadd.f32 0.0, %v860
        %862 = vmatmul.f32.gmra.mxu0 %v820
        %v863 = vpop.f32.mrf.mxu0
        %v864 = vadd.f32 0.0, %v863
        %865 = vmatmul.f32.gmra.mxu0 %v821
        %v866 = vpop.f32.mrf.mxu0
        %v867 = vadd.f32 0.0, %v866
        %868 = vmatmul.f32.gmra.mxu0 %v822
        %v869 = vpop.f32.mrf.mxu0
        %v870 = vadd.f32 0.0, %v869
        %871 = vmatmul.f32.gmra.mxu0 %v823
        %v872 = vpop.f32.mrf.mxu0
        %v873 = vadd.f32 0.0, %v872
        %874 = vmatmul.f32.gmra.mxu0 %v824
        %v875 = vpop.f32.mrf.mxu0
        %v876 = vadd.f32 0.0, %v875
        %877 = vmatmul.f32.gmra.mxu0 %v825
        %v878 = vpop.f32.mrf.mxu0
        %v879 = vadd.f32 0.0, %v878
        %880 = vmatmul.f32.gmra.mxu0 %v826
        %v881 = vpop.f32.mrf.mxu0
        %v882 = vadd.f32 0.0, %v881
        %883 = vmatmul.f32.gmra.mxu0 %v827
        %v884 = vpop.f32.mrf.mxu0
        %v885 = vadd.f32 0.0, %v884
        %886 = vmatmul.f32.gmra.mxu0 %v828
        %v887 = vpop.f32.mrf.mxu0
        %v888 = vadd.f32 0.0, %v887
        %889 = vmatmul.f32.gmra.mxu0 %v829
        %v890 = vpop.f32.mrf.mxu0
        %v891 = vadd.f32 0.0, %v890
        %892 = vmatmul.f32.gmra.mxu0 %v830
        %v893 = vpop.f32.mrf.mxu0
        %v894 = vadd.f32 0.0, %v893
        %895 = vdwg.mxu0
        %896 = vrot.lane.b32.xlu0 %v348, 64
        %v897 = vpop.permute.xlu0 %896
        %898 = vrot.lane.b32.xlu0 %v351, 64
        %v899 = vpop.permute.xlu0 %898
        %900 = vrot.lane.b32.xlu0 %v354, 64
        %v901 = vpop.permute.xlu0 %900
        %902 = vrot.lane.b32.xlu0 %v357, 64
        %v903 = vpop.permute.xlu0 %902
        %904 = vrot.lane.b32.xlu0 %v360, 64
        %v905 = vpop.permute.xlu0 %904
        %906 = vrot.lane.b32.xlu0 %v363, 64
        %v907 = vpop.permute.xlu0 %906
        %908 = vrot.lane.b32.xlu0 %v366, 64
        %v909 = vpop.permute.xlu0 %908
        %910 = vrot.lane.b32.xlu0 %v369, 64
        %v911 = vpop.permute.xlu0 %910
        %912 = vrot.lane.b32.xlu0 %v372, 64
        %v913 = vpop.permute.xlu0 %912
        %914 = vrot.lane.b32.xlu0 %v375, 64
        %v915 = vpop.permute.xlu0 %914
        %916 = vrot.lane.b32.xlu0 %v378, 64
        %v917 = vpop.permute.xlu0 %916
        %918 = vrot.lane.b32.xlu0 %v381, 64
        %v919 = vpop.permute.xlu0 %918
        %920 = vrot.lane.b32.xlu0 %v384, 64
        %v921 = vpop.permute.xlu0 %920
        %922 = vrot.lane.b32.xlu0 %v387, 64
        %v923 = vpop.permute.xlu0 %922
        %924 = vrot.lane.b32.xlu0 %v390, 64
        %v925 = vpop.permute.xlu0 %924
        %926 = vrot.lane.b32.xlu0 %v393, 64
        %v927 = vpop.permute.xlu0 %926
        %928 = vrot.lane.b32.xlu0 %v413, 64
        %v929 = vpop.permute.xlu0 %928
        %930 = vrot.lane.b32.xlu0 %v416, 64
        %v931 = vpop.permute.xlu0 %930
        %932 = vrot.lane.b32.xlu0 %v419, 64
        %v933 = vpop.permute.xlu0 %932
        %934 = vrot.lane.b32.xlu0 %v422, 64
        %v935 = vpop.permute.xlu0 %934
        %936 = vrot.lane.b32.xlu0 %v425, 64
        %v937 = vpop.permute.xlu0 %936
        %938 = vrot.lane.b32.xlu0 %v428, 64
        %v939 = vpop.permute.xlu0 %938
        %940 = vrot.lane.b32.xlu0 %v431, 64
        %v941 = vpop.permute.xlu0 %940
        %942 = vrot.lane.b32.xlu0 %v434, 64
        %v943 = vpop.permute.xlu0 %942
        %944 = vrot.lane.b32.xlu0 %v437, 64
        %v945 = vpop.permute.xlu0 %944
        %946 = vrot.lane.b32.xlu0 %v440, 64
        %v947 = vpop.permute.xlu0 %946
        %948 = vrot.lane.b32.xlu0 %v443, 64
        %v949 = vpop.permute.xlu0 %948
        %950 = vrot.lane.b32.xlu0 %v446, 64
        %v951 = vpop.permute.xlu0 %950
        %952 = vrot.lane.b32.xlu0 %v449, 64
        %v953 = vpop.permute.xlu0 %952
        %954 = vrot.lane.b32.xlu0 %v452, 64
        %v955 = vpop.permute.xlu0 %954
        %956 = vrot.lane.b32.xlu0 %v455, 64
        %v957 = vpop.permute.xlu0 %956
        %958 = vrot.lane.b32.xlu0 %v458, 64
        %v959 = vpop.permute.xlu0 %958
        %v960 = vsel %vm525, %v897, 0
        %v962 = vsel %vm525, %v899, 0
        %v964 = vsel %vm525, %v901, 0
        %v966 = vsel %vm525, %v903, 0
        %v968 = vsel %vm525, %v905, 0
        %v970 = vsel %vm525, %v907, 0
        %v972 = vsel %vm525, %v909, 0
        %v974 = vsel %vm525, %v911, 0
        %v976 = vsel %vm525, %v913, 0
        %v978 = vsel %vm525, %v915, 0
        %v980 = vsel %vm525, %v917, 0
        %v982 = vsel %vm525, %v919, 0
        %v984 = vsel %vm525, %v921, 0
        %v986 = vsel %vm525, %v923, 0
        %v988 = vsel %vm525, %v925, 0
        %v990 = vsel %vm525, %v927, 0
        %v992 = vsel %vm525, %v929, 0
        %v994 = vsel %vm525, %v931, 0
        %v996 = vsel %vm525, %v933, 0
        %v998 = vsel %vm525, %v935, 0
        %v1000 = vsel %vm525, %v937, 0
        %v1002 = vsel %vm525, %v939, 0
        %v1004 = vsel %vm525, %v941, 0
        %v1006 = vsel %vm525, %v943, 0
        %v1008 = vsel %vm525, %v945, 0
        %v1010 = vsel %vm525, %v947, 0
        %v1012 = vsel %vm525, %v949, 0
        %v1014 = vsel %vm525, %v951, 0
        %v1016 = vsel %vm525, %v953, 0
        %v1018 = vsel %vm525, %v955, 0
        %v1020 = vsel %vm525, %v957, 0
        %v1022 = vsel %vm525, %v959, 0
        %1024 = vmatpush.xpose.msra.mxu0 %v1022
        %1025 = vmatpush.xpose.msra.mxu0 %v1020
        %1026 = vmatpush.xpose.msra.mxu0 %v1018
        %1027 = vmatpush.xpose.msra.mxu0 %v1016
        %1028 = vmatpush.xpose.msra.mxu0 %v1014
        %1029 = vmatpush.xpose.msra.mxu0 %v1012
        %1030 = vmatpush.xpose.msra.mxu0 %v1010
        %1031 = vmatpush.xpose.msra.mxu0 %v1008
        %1032 = vmatpush.xpose.msra.mxu0 %v1006
        %1033 = vmatpush.xpose.msra.mxu0 %v1004
        %1034 = vmatpush.xpose.msra.mxu0 %v1002
        %1035 = vmatpush.xpose.msra.mxu0 %v1000
        %1036 = vmatpush.xpose.msra.mxu0 %v998
        %1037 = vmatpush.xpose.msra.mxu0 %v996
        %1038 = vmatpush.xpose.msra.mxu0 %v994
        %1039 = vmatpush.xpose.msra.mxu0 %v992
        %1040 = vmatmul.f32.gmra.mxu0 %v960
        %v1041 = vpop.f32.mrf.mxu0
        %v1042 = vadd.f32 0.0, %v1041
        %1043 = vmatmul.f32.gmra.mxu0 %v962
        %v1044 = vpop.f32.mrf.mxu0
        %v1045 = vadd.f32 0.0, %v1044
        %1046 = vmatmul.f32.gmra.mxu0 %v964
        %v1047 = vpop.f32.mrf.mxu0
        %v1048 = vadd.f32 0.0, %v1047
        %1049 = vmatmul.f32.gmra.mxu0 %v966
        %v1050 = vpop.f32.mrf.mxu0
        %v1051 = vadd.f32 0.0, %v1050
        %1052 = vmatmul.f32.gmra.mxu0 %v968
        %v1053 = vpop.f32.mrf.mxu0
        %v1054 = vadd.f32 0.0, %v1053
        %1055 = vmatmul.f32.gmra.mxu0 %v970
        %v1056 = vpop.f32.mrf.mxu0
        %v1057 = vadd.f32 0.0, %v1056
        %1058 = vmatmul.f32.gmra.mxu0 %v972
        %v1059 = vpop.f32.mrf.mxu0
        %v1060 = vadd.f32 0.0, %v1059
        %1061 = vmatmul.f32.gmra.mxu0 %v974
        %v1062 = vpop.f32.mrf.mxu0
        %v1063 = vadd.f32 0.0, %v1062
        %1064 = vmatmul.f32.gmra.mxu0 %v976
        %v1065 = vpop.f32.mrf.mxu0
        %v1066 = vadd.f32 0.0, %v1065
        %1067 = vmatmul.f32.gmra.mxu0 %v978
        %v1068 = vpop.f32.mrf.mxu0
        %v1069 = vadd.f32 0.0, %v1068
        %1070 = vmatmul.f32.gmra.mxu0 %v980
        %v1071 = vpop.f32.mrf.mxu0
        %v1072 = vadd.f32 0.0, %v1071
        %1073 = vmatmul.f32.gmra.mxu0 %v982
        %v1074 = vpop.f32.mrf.mxu0
        %v1075 = vadd.f32 0.0, %v1074
        %1076 = vmatmul.f32.gmra.mxu0 %v984
        %v1077 = vpop.f32.mrf.mxu0
        %v1078 = vadd.f32 0.0, %v1077
        %1079 = vmatmul.f32.gmra.mxu0 %v986
        %v1080 = vpop.f32.mrf.mxu0
        %v1081 = vadd.f32 0.0, %v1080
        %1082 = vmatmul.f32.gmra.mxu0 %v988
        %v1083 = vpop.f32.mrf.mxu0
        %v1084 = vadd.f32 0.0, %v1083
        %1085 = vmatmul.f32.gmra.mxu0 %v990
        %v1086 = vpop.f32.mrf.mxu0
        %v1087 = vadd.f32 0.0, %v1086
        %1088 = vdwg.mxu0
        %1089 = vmax.xlane.f32.xlu0 %v1042
        %v1090 = vpop.xlane.xlu0 %1089
        %1091 = vmax.xlane.f32.xlu0 %v1045
        %v1092 = vpop.xlane.xlu0 %1091
        %1093 = vmax.xlane.f32.xlu0 %v1048
        %v1094 = vpop.xlane.xlu0 %1093
        %1095 = vmax.xlane.f32.xlu0 %v1051
        %v1096 = vpop.xlane.xlu0 %1095
        %1097 = vmax.xlane.f32.xlu0 %v1054
        %v1098 = vpop.xlane.xlu0 %1097
        %1099 = vmax.xlane.f32.xlu0 %v1057
        %v1100 = vpop.xlane.xlu0 %1099
        %1101 = vmax.xlane.f32.xlu0 %v1060
        %v1102 = vpop.xlane.xlu0 %1101
        %1103 = vmax.xlane.f32.xlu0 %v1063
        %v1104 = vpop.xlane.xlu0 %1103
        %1105 = vmax.xlane.f32.xlu0 %v1066
        %v1106 = vpop.xlane.xlu0 %1105
        %1107 = vmax.xlane.f32.xlu0 %v1069
        %v1108 = vpop.xlane.xlu0 %1107
        %1109 = vmax.xlane.f32.xlu0 %v1072
        %v1110 = vpop.xlane.xlu0 %1109
        %1111 = vmax.xlane.f32.xlu0 %v1075
        %v1112 = vpop.xlane.xlu0 %1111
        %1113 = vmax.xlane.f32.xlu0 %v1078
        %v1114 = vpop.xlane.xlu0 %1113
        %1115 = vmax.xlane.f32.xlu0 %v1081
        %v1116 = vpop.xlane.xlu0 %1115
        %1117 = vmax.xlane.f32.xlu0 %v1084
        %v1118 = vpop.xlane.xlu0 %1117
        %1119 = vmax.xlane.f32.xlu0 %v1087
        %v1120 = vpop.xlane.xlu0 %1119
        %v1121 = vsub.f32 %v1042, %v1090
        %v1122 = vsub.f32 %v1045, %v1092
        %v1123 = vsub.f32 %v1048, %v1094
        %v1124 = vsub.f32 %v1051, %v1096
        %v1125 = vsub.f32 %v1054, %v1098
        %v1126 = vsub.f32 %v1057, %v1100
        %v1127 = vsub.f32 %v1060, %v1102
        %v1128 = vsub.f32 %v1063, %v1104
        %v1129 = vsub.f32 %v1066, %v1106
        %v1130 = vsub.f32 %v1069, %v1108
        %v1131 = vsub.f32 %v1072, %v1110
        %v1132 = vsub.f32 %v1075, %v1112
        %v1133 = vsub.f32 %v1078, %v1114
        %v1134 = vsub.f32 %v1081, %v1116
        %v1135 = vsub.f32 %v1084, %v1118
        %v1136 = vsub.f32 %v1087, %v1120
        %v1137 = vmul.f32 %v1121, 1.442695
        %v1138 = vpow.pop %v1137
        %v1139 = vmul.f32 %v1122, 1.442695
        %v1140 = vpow.pop %v1139
        %v1141 = vmul.f32 %v1123, 1.442695
        %v1142 = vpow.pop %v1141
        %v1143 = vmul.f32 %v1124, 1.442695
        %v1144 = vpow.pop %v1143
        %v1145 = vmul.f32 %v1125, 1.442695
        %v1146 = vpow.pop %v1145
        %v1147 = vmul.f32 %v1126, 1.442695
        %v1148 = vpow.pop %v1147
        %v1149 = vmul.f32 %v1127, 1.442695
        %v1150 = vpow.pop %v1149
        %v1151 = vmul.f32 %v1128, 1.442695
        %v1152 = vpow.pop %v1151
        %v1153 = vmul.f32 %v1129, 1.442695
        %v1154 = vpow.pop %v1153
        %v1155 = vmul.f32 %v1130, 1.442695
        %v1156 = vpow.pop %v1155
        %v1157 = vmul.f32 %v1131, 1.442695
        %v1158 = vpow.pop %v1157
        %v1159 = vmul.f32 %v1132, 1.442695
        %v1160 = vpow.pop %v1159
        %v1161 = vmul.f32 %v1133, 1.442695
        %v1162 = vpow.pop %v1161
        %v1163 = vmul.f32 %v1134, 1.442695
        %v1164 = vpow.pop %v1163
        %v1165 = vmul.f32 %v1135, 1.442695
        %v1166 = vpow.pop %v1165
        %v1167 = vmul.f32 %v1136, 1.442695
        %v1168 = vpow.pop %v1167
        %1169 = vadd.xlane.f32.xlu0 %v1138
        %v1170 = vpop.xlane.xlu0 %1169
        %1171 = vadd.xlane.f32.xlu0 %v1140
        %v1172 = vpop.xlane.xlu0 %1171
        %1173 = vadd.xlane.f32.xlu0 %v1142
        %v1174 = vpop.xlane.xlu0 %1173
        %1175 = vadd.xlane.f32.xlu0 %v1144
        %v1176 = vpop.xlane.xlu0 %1175
        %1177 = vadd.xlane.f32.xlu0 %v1146
        %v1178 = vpop.xlane.xlu0 %1177
        %1179 = vadd.xlane.f32.xlu0 %v1148
        %v1180 = vpop.xlane.xlu0 %1179
        %1181 = vadd.xlane.f32.xlu0 %v1150
        %v1182 = vpop.xlane.xlu0 %1181
        %1183 = vadd.xlane.f32.xlu0 %v1152
        %v1184 = vpop.xlane.xlu0 %1183
        %1185 = vadd.xlane.f32.xlu0 %v1154
        %v1186 = vpop.xlane.xlu0 %1185
        %1187 = vadd.xlane.f32.xlu0 %v1156
        %v1188 = vpop.xlane.xlu0 %1187
        %1189 = vadd.xlane.f32.xlu0 %v1158
        %v1190 = vpop.xlane.xlu0 %1189
        %1191 = vadd.xlane.f32.xlu0 %v1160
        %v1192 = vpop.xlane.xlu0 %1191
        %1193 = vadd.xlane.f32.xlu0 %v1162
        %v1194 = vpop.xlane.xlu0 %1193
        %1195 = vadd.xlane.f32.xlu0 %v1164
        %v1196 = vpop.xlane.xlu0 %1195
        %1197 = vadd.xlane.f32.xlu0 %v1166
        %v1198 = vpop.xlane.xlu0 %1197
        %1199 = vadd.xlane.f32.xlu0 %v1168
        %v1200 = vpop.xlane.xlu0 %1199
        %v1201 = vrcp.pop %v1170
        %v1202 = vrcp.pop %v1172
        %v1203 = vrcp.pop %v1174
        %v1204 = vrcp.pop %v1176
        %v1205 = vrcp.pop %v1178
        %v1206 = vrcp.pop %v1180
        %v1207 = vrcp.pop %v1182
        %v1208 = vrcp.pop %v1184
        %v1209 = vrcp.pop %v1186
        %v1210 = vrcp.pop %v1188
        %v1211 = vrcp.pop %v1190
        %v1212 = vrcp.pop %v1192
        %v1213 = vrcp.pop %v1194
        %v1214 = vrcp.pop %v1196
        %v1215 = vrcp.pop %v1198
        %v1216 = vrcp.pop %v1200
        %v1217 = vmul.f32 %v1138, %v1201
        %v1218 = vmul.f32 %v1140, %v1202
        %v1219 = vmul.f32 %v1142, %v1203
        %v1220 = vmul.f32 %v1144, %v1204
        %v1221 = vmul.f32 %v1146, %v1205
        %v1222 = vmul.f32 %v1148, %v1206
        %v1223 = vmul.f32 %v1150, %v1207
        %v1224 = vmul.f32 %v1152, %v1208
        %v1225 = vmul.f32 %v1154, %v1209
        %v1226 = vmul.f32 %v1156, %v1210
        %v1227 = vmul.f32 %v1158, %v1211
        %v1228 = vmul.f32 %v1160, %v1212
        %v1229 = vmul.f32 %v1162, %v1213
        %v1230 = vmul.f32 %v1164, %v1214
        %v1231 = vmul.f32 %v1166, %v1215
        %v1232 = vmul.f32 %v1168, %v1216
        %1249 = vrot.lane.b32.xlu0 %v478, 64
        %v1250 = vpop.permute.xlu0 %1249
        %1251 = vrot.lane.b32.xlu0 %v481, 64
        %v1252 = vpop.permute.xlu0 %1251
        %1253 = vrot.lane.b32.xlu0 %v484, 64
        %v1254 = vpop.permute.xlu0 %1253
        %1255 = vrot.lane.b32.xlu0 %v487, 64
        %v1256 = vpop.permute.xlu0 %1255
        %1257 = vrot.lane.b32.xlu0 %v490, 64
        %v1258 = vpop.permute.xlu0 %1257
        %1259 = vrot.lane.b32.xlu0 %v493, 64
        %v1260 = vpop.permute.xlu0 %1259
        %1261 = vrot.lane.b32.xlu0 %v496, 64
        %v1262 = vpop.permute.xlu0 %1261
        %1263 = vrot.lane.b32.xlu0 %v499, 64
        %v1264 = vpop.permute.xlu0 %1263
        %1265 = vrot.lane.b32.xlu0 %v502, 64
        %v1266 = vpop.permute.xlu0 %1265
        %1267 = vrot.lane.b32.xlu0 %v505, 64
        %v1268 = vpop.permute.xlu0 %1267
        %1269 = vrot.lane.b32.xlu0 %v508, 64
        %v1270 = vpop.permute.xlu0 %1269
        %1271 = vrot.lane.b32.xlu0 %v511, 64
        %v1272 = vpop.permute.xlu0 %1271
        %1273 = vrot.lane.b32.xlu0 %v514, 64
        %v1274 = vpop.permute.xlu0 %1273
        %1275 = vrot.lane.b32.xlu0 %v517, 64
        %v1276 = vpop.permute.xlu0 %1275
        %1277 = vrot.lane.b32.xlu0 %v520, 64
        %v1278 = vpop.permute.xlu0 %1277
        %1279 = vrot.lane.b32.xlu0 %v523, 64
        %v1280 = vpop.permute.xlu0 %1279
        %1297 = vmatpush.msra.mxu0 %v1280
        %1298 = vmatpush.msra.mxu0 %v1278
        %1299 = vmatpush.msra.mxu0 %v1276
        %1300 = vmatpush.msra.mxu0 %v1274
        %1301 = vmatpush.msra.mxu0 %v1272
        %1302 = vmatpush.msra.mxu0 %v1270
        %1303 = vmatpush.msra.mxu0 %v1268
        %1304 = vmatpush.msra.mxu0 %v1266
        %1305 = vmatpush.msra.mxu0 %v1264
        %1306 = vmatpush.msra.mxu0 %v1262
        %1307 = vmatpush.msra.mxu0 %v1260
        %1308 = vmatpush.msra.mxu0 %v1258
        %1309 = vmatpush.msra.mxu0 %v1256
        %1310 = vmatpush.msra.mxu0 %v1254
        %1311 = vmatpush.msra.mxu0 %v1252
        %1312 = vmatpush.msra.mxu0 %v1250
        %1313 = vmatmul.f32.gmra.mxu0 %v1217
        %v1314 = vpop.f32.mrf.mxu0
        %v1315 = vadd.f32 0.0, %v1314
        %1316 = vmatmul.f32.gmra.mxu0 %v1218
        %v1317 = vpop.f32.mrf.mxu0
        %v1318 = vadd.f32 0.0, %v1317
        %1319 = vmatmul.f32.gmra.mxu0 %v1219
        %v1320 = vpop.f32.mrf.mxu0
        %v1321 = vadd.f32 0.0, %v1320
        %1322 = vmatmul.f32.gmra.mxu0 %v1220
        %v1323 = vpop.f32.mrf.mxu0
        %v1324 = vadd.f32 0.0, %v1323
        %1325 = vmatmul.f32.gmra.mxu0 %v1221
        %v1326 = vpop.f32.mrf.mxu0
        %v1327 = vadd.f32 0.0, %v1326
        %1328 = vmatmul.f32.gmra.mxu0 %v1222
        %v1329 = vpop.f32.mrf.mxu0
        %v1330 = vadd.f32 0.0, %v1329
        %1331 = vmatmul.f32.gmra.mxu0 %v1223
        %v1332 = vpop.f32.mrf.mxu0
        %v1333 = vadd.f32 0.0, %v1332
        %1334 = vmatmul.f32.gmra.mxu0 %v1224
        %v1335 = vpop.f32.mrf.mxu0
        %v1336 = vadd.f32 0.0, %v1335
        %1337 = vmatmul.f32.gmra.mxu0 %v1225
        %v1338 = vpop.f32.mrf.mxu0
        %v1339 = vadd.f32 0.0, %v1338
        %1340 = vmatmul.f32.gmra.mxu0 %v1226
        %v1341 = vpop.f32.mrf.mxu0
        %v1342 = vadd.f32 0.0, %v1341
        %1343 = vmatmul.f32.gmra.mxu0 %v1227
        %v1344 = vpop.f32.mrf.mxu0
        %v1345 = vadd.f32 0.0, %v1344
        %1346 = vmatmul.f32.gmra.mxu0 %v1228
        %v1347 = vpop.f32.mrf.mxu0
        %v1348 = vadd.f32 0.0, %v1347
        %1349 = vmatmul.f32.gmra.mxu0 %v1229
        %v1350 = vpop.f32.mrf.mxu0
        %v1351 = vadd.f32 0.0, %v1350
        %1352 = vmatmul.f32.gmra.mxu0 %v1230
        %v1353 = vpop.f32.mrf.mxu0
        %v1354 = vadd.f32 0.0, %v1353
        %1355 = vmatmul.f32.gmra.mxu0 %v1231
        %v1356 = vpop.f32.mrf.mxu0
        %v1357 = vadd.f32 0.0, %v1356
        %1358 = vmatmul.f32.gmra.mxu0 %v1232
        %v1359 = vpop.f32.mrf.mxu0
        %v1360 = vadd.f32 0.0, %v1359
        %1361 = vdwg.mxu0
        %1378 = vrot.lane.b32.xlu0 %v1315, 64
        %v1379 = vpop.permute.xlu0 %1378
        %1380 = vrot.lane.b32.xlu0 %v1318, 64
        %v1381 = vpop.permute.xlu0 %1380
        %1382 = vrot.lane.b32.xlu0 %v1321, 64
        %v1383 = vpop.permute.xlu0 %1382
        %1384 = vrot.lane.b32.xlu0 %v1324, 64
        %v1385 = vpop.permute.xlu0 %1384
        %1386 = vrot.lane.b32.xlu0 %v1327, 64
        %v1387 = vpop.permute.xlu0 %1386
        %1388 = vrot.lane.b32.xlu0 %v1330, 64
        %v1389 = vpop.permute.xlu0 %1388
        %1390 = vrot.lane.b32.xlu0 %v1333, 64
        %v1391 = vpop.permute.xlu0 %1390
        %1392 = vrot.lane.b32.xlu0 %v1336, 64
        %v1393 = vpop.permute.xlu0 %1392
        %1394 = vrot.lane.b32.xlu0 %v1339, 64
        %v1395 = vpop.permute.xlu0 %1394
        %1396 = vrot.lane.b32.xlu0 %v1342, 64
        %v1397 = vpop.permute.xlu0 %1396
        %1398 = vrot.lane.b32.xlu0 %v1345, 64
        %v1399 = vpop.permute.xlu0 %1398
        %1400 = vrot.lane.b32.xlu0 %v1348, 64
        %v1401 = vpop.permute.xlu0 %1400
        %1402 = vrot.lane.b32.xlu0 %v1351, 64
        %v1403 = vpop.permute.xlu0 %1402
        %1404 = vrot.lane.b32.xlu0 %v1354, 64
        %v1405 = vpop.permute.xlu0 %1404
        %1406 = vrot.lane.b32.xlu0 %v1357, 64
        %v1407 = vpop.permute.xlu0 %1406
        %1408 = vrot.lane.b32.xlu0 %v1360, 64
        %v1409 = vpop.permute.xlu0 %1408
        %v1426 = vsel %vm525, %v849, %v1379
        %v1427 = vsel %vm525, %v852, %v1381
        %v1428 = vsel %vm525, %v855, %v1383
        %v1429 = vsel %vm525, %v858, %v1385
        %v1430 = vsel %vm525, %v861, %v1387
        %v1431 = vsel %vm525, %v864, %v1389
        %v1432 = vsel %vm525, %v867, %v1391
        %v1433 = vsel %vm525, %v870, %v1393
        %v1434 = vsel %vm525, %v873, %v1395
        %v1435 = vsel %vm525, %v876, %v1397
        %v1436 = vsel %vm525, %v879, %v1399
        %v1437 = vsel %vm525, %v882, %v1401
        %v1438 = vsel %vm525, %v885, %v1403
        %v1439 = vsel %vm525, %v888, %v1405
        %v1440 = vsel %vm525, %v891, %v1407
        %v1441 = vsel %vm525, %v894, %v1409
        %s1442 = smul.u32 %s27, 128
        %s1443 = scalar_lea.vmem [#allocation7], %s1442
        %v1444 = vld [vmem:[%s1443] sm:$0xff]
        %v1445 = vld [vmem:[%s1443 + $0x8] sm:$0xff]
        %v1446 = vld [vmem:[%s1443 + $0x10] sm:$0xff]
        %v1447 = vld [vmem:[%s1443 + $0x18] sm:$0xff]
        %v1448 = vld [vmem:[%s1443 + $0x20] sm:$0xff]
        %v1449 = vld [vmem:[%s1443 + $0x28] sm:$0xff]
        %v1450 = vld [vmem:[%s1443 + $0x30] sm:$0xff]
        %v1451 = vld [vmem:[%s1443 + $0x38] sm:$0xff]
        %v1452 = vld [vmem:[%s1443 + $0x40] sm:$0xff]
        %v1453 = vld [vmem:[%s1443 + $0x48] sm:$0xff]
        %v1454 = vld [vmem:[%s1443 + $0x50] sm:$0xff]
        %v1455 = vld [vmem:[%s1443 + $0x58] sm:$0xff]
        %v1456 = vld [vmem:[%s1443 + $0x60] sm:$0xff]
        %v1457 = vld [vmem:[%s1443 + $0x68] sm:$0xff]
        %v1458 = vld [vmem:[%s1443 + $0x70] sm:$0xff]
        %v1459 = vld [vmem:[%s1443 + $0x78] sm:$0xff]
        %1460 = vmatpush.msra.mxu0 %v1459
        %1461 = vmatpush.msra.mxu0 %v1458
        %1462 = vmatpush.msra.mxu0 %v1457
        %1463 = vmatpush.msra.mxu0 %v1456
        %1464 = vmatpush.msra.mxu0 %v1455
        %1465 = vmatpush.msra.mxu0 %v1454
        %1466 = vmatpush.msra.mxu0 %v1453
        %1467 = vmatpush.msra.mxu0 %v1452
        %1468 = vmatpush.msra.mxu0 %v1451
        %1469 = vmatpush.msra.mxu0 %v1450
        %1470 = vmatpush.msra.mxu0 %v1449
        %1471 = vmatpush.msra.mxu0 %v1448
        %1472 = vmatpush.msra.mxu0 %v1447
        %1473 = vmatpush.msra.mxu0 %v1446
        %1474 = vmatpush.msra.mxu0 %v1445
        %1475 = vmatpush.msra.mxu0 %v1444
        %1476 = vmatmul.f32.gmra.mxu0 %v1426
        %v1477 = vpop.f32.mrf.mxu0
        %v1478 = vadd.f32 0.0, %v1477
        %1479 = vmatmul.f32.gmra.mxu0 %v1427
        %v1480 = vpop.f32.mrf.mxu0
        %v1481 = vadd.f32 0.0, %v1480
        %1482 = vmatmul.f32.gmra.mxu0 %v1428
        %v1483 = vpop.f32.mrf.mxu0
        %v1484 = vadd.f32 0.0, %v1483
        %1485 = vmatmul.f32.gmra.mxu0 %v1429
        %v1486 = vpop.f32.mrf.mxu0
        %v1487 = vadd.f32 0.0, %v1486
        %1488 = vmatmul.f32.gmra.mxu0 %v1430
        %v1489 = vpop.f32.mrf.mxu0
        %v1490 = vadd.f32 0.0, %v1489
        %1491 = vmatmul.f32.gmra.mxu0 %v1431
        %v1492 = vpop.f32.mrf.mxu0
        %v1493 = vadd.f32 0.0, %v1492
        %1494 = vmatmul.f32.gmra.mxu0 %v1432
        %v1495 = vpop.f32.mrf.mxu0
        %v1496 = vadd.f32 0.0, %v1495
        %1497 = vmatmul.f32.gmra.mxu0 %v1433
        %v1498 = vpop.f32.mrf.mxu0
        %v1499 = vadd.f32 0.0, %v1498
        %1500 = vmatmul.f32.gmra.mxu0 %v1434
        %v1501 = vpop.f32.mrf.mxu0
        %v1502 = vadd.f32 0.0, %v1501
        %1503 = vmatmul.f32.gmra.mxu0 %v1435
        %v1504 = vpop.f32.mrf.mxu0
        %v1505 = vadd.f32 0.0, %v1504
        %1506 = vmatmul.f32.gmra.mxu0 %v1436
        %v1507 = vpop.f32.mrf.mxu0
        %v1508 = vadd.f32 0.0, %v1507
        %1509 = vmatmul.f32.gmra.mxu0 %v1437
        %v1510 = vpop.f32.mrf.mxu0
        %v1511 = vadd.f32 0.0, %v1510
        %1512 = vmatmul.f32.gmra.mxu0 %v1438
        %v1513 = vpop.f32.mrf.mxu0
        %v1514 = vadd.f32 0.0, %v1513
        %1515 = vmatmul.f32.gmra.mxu0 %v1439
        %v1516 = vpop.f32.mrf.mxu0
        %v1517 = vadd.f32 0.0, %v1516
        %1518 = vmatmul.f32.gmra.mxu0 %v1440
        %v1519 = vpop.f32.mrf.mxu0
        %v1520 = vadd.f32 0.0, %v1519
        %1521 = vmatmul.f32.gmra.mxu0 %v1441
        %v1522 = vpop.f32.mrf.mxu0
        %v1523 = vadd.f32 0.0, %v1522
        %1524 = vdwg.mxu0
        %v1525 = vld [vmem:[%s3] sm:$0x1]
        %p1526 = scmp.eq.s32.totalorder %s27, 0
        // Predicated region
        $region49: #{tpu_custom_call.1} parent=35 // pred_check
          %p1527 = pneg %p1526
        $region50: #{tpu_custom_call.1} parent=35 // pred_check_branch
          %1529 = sbr.rel (%p1527) target = $region52
        $region51: #{tpu_custom_call.1} parent=35 // pred_region
          %v1531 = vperm.slane %v1525, 0
          %v1533 = vadd.f32 %v1478, %v1531
          %v1534 = vadd.f32 %v1481, %v1531
          %v1535 = vadd.f32 %v1484, %v1531
          %v1536 = vadd.f32 %v1487, %v1531
          %v1537 = vadd.f32 %v1490, %v1531
          %v1538 = vadd.f32 %v1493, %v1531
          %v1539 = vadd.f32 %v1496, %v1531
          %v1540 = vadd.f32 %v1499, %v1531
          %v1541 = vadd.f32 %v1502, %v1531
          %v1542 = vadd.f32 %v1505, %v1531
          %v1543 = vadd.f32 %v1508, %v1531
          %v1544 = vadd.f32 %v1511, %v1531
          %v1545 = vadd.f32 %v1514, %v1531
          %v1546 = vadd.f32 %v1517, %v1531
          %v1547 = vadd.f32 %v1520, %v1531
          %v1548 = vadd.f32 %v1523, %v1531
          %1549 = vst [vmem:[%s262] sm:$0xff] %v1533
          %1550 = vst [vmem:[%s262 + $0x8] sm:$0xff] %v1534
          %1551 = vst [vmem:[%s262 + $0x10] sm:$0xff] %v1535
          %1552 = vst [vmem:[%s262 + $0x18] sm:$0xff] %v1536
          %1553 = vst [vmem:[%s262 + $0x20] sm:$0xff] %v1537
          %1554 = vst [vmem:[%s262 + $0x28] sm:$0xff] %v1538
          %1555 = vst [vmem:[%s262 + $0x30] sm:$0xff] %v1539
          %1556 = vst [vmem:[%s262 + $0x38] sm:$0xff] %v1540
          %1557 = vst [vmem:[%s262 + $0x40] sm:$0xff] %v1541
          %1558 = vst [vmem:[%s262 + $0x48] sm:$0xff] %v1542
          %1559 = vst [vmem:[%s262 + $0x50] sm:$0xff] %v1543
          %1560 = vst [vmem:[%s262 + $0x58] sm:$0xff] %v1544
          %1561 = vst [vmem:[%s262 + $0x60] sm:$0xff] %v1545
          %1562 = vst [vmem:[%s262 + $0x68] sm:$0xff] %v1546
          %1563 = vst [vmem:[%s262 + $0x70] sm:$0xff] %v1547
          %1564 = vst [vmem:[%s262 + $0x78] sm:$0xff] %v1548
        $region52: #{tpu_custom_call.1} parent=35 // pred_fallthru
          _
        %p1565 = scmp.gt.s32.totalorder %s27, 0
        // Predicated region
        $region53: #{tpu_custom_call.1} parent=35 // pred_check
          %p1566 = pneg %p1565
        $region54: #{tpu_custom_call.1} parent=35 // pred_check_branch
          %1568 = sbr.rel (%p1566) target = $region56
        $region55: #{tpu_custom_call.1} parent=35 // pred_region
          %v1569 = vld [vmem:[%s262] sm:$0xff]
          %v1570 = vld [vmem:[%s262 + $0x8] sm:$0xff]
          %v1571 = vld [vmem:[%s262 + $0x10] sm:$0xff]
          %v1572 = vld [vmem:[%s262 + $0x18] sm:$0xff]
          %v1573 = vld [vmem:[%s262 + $0x20] sm:$0xff]
          %v1574 = vld [vmem:[%s262 + $0x28] sm:$0xff]
          %v1575 = vld [vmem:[%s262 + $0x30] sm:$0xff]
          %v1576 = vld [vmem:[%s262 + $0x38] sm:$0xff]
          %v1577 = vld [vmem:[%s262 + $0x40] sm:$0xff]
          %v1578 = vld [vmem:[%s262 + $0x48] sm:$0xff]
          %v1579 = vld [vmem:[%s262 + $0x50] sm:$0xff]
          %v1580 = vld [vmem:[%s262 + $0x58] sm:$0xff]
          %v1581 = vld [vmem:[%s262 + $0x60] sm:$0xff]
          %v1582 = vld [vmem:[%s262 + $0x68] sm:$0xff]
          %v1583 = vld [vmem:[%s262 + $0x70] sm:$0xff]
          %v1584 = vld [vmem:[%s262 + $0x78] sm:$0xff]
          %v1585 = vadd.f32 %v1569, %v1478
          %v1586 = vadd.f32 %v1570, %v1481
          %v1587 = vadd.f32 %v1571, %v1484
          %v1588 = vadd.f32 %v1572, %v1487
          %v1589 = vadd.f32 %v1573, %v1490
          %v1590 = vadd.f32 %v1574, %v1493
          %v1591 = vadd.f32 %v1575, %v1496
          %v1592 = vadd.f32 %v1576, %v1499
          %v1593 = vadd.f32 %v1577, %v1502
          %v1594 = vadd.f32 %v1578, %v1505
          %v1595 = vadd.f32 %v1579, %v1508
          %v1596 = vadd.f32 %v1580, %v1511
          %v1597 = vadd.f32 %v1581, %v1514
          %v1598 = vadd.f32 %v1582, %v1517
          %v1599 = vadd.f32 %v1583, %v1520
          %v1600 = vadd.f32 %v1584, %v1523
          %1601 = vst [vmem:[%s262] sm:$0xff] %v1585
          %1602 = vst [vmem:[%s262 + $0x8] sm:$0xff] %v1586
          %1603 = vst [vmem:[%s262 + $0x10] sm:$0xff] %v1587
          %1604 = vst [vmem:[%s262 + $0x18] sm:$0xff] %v1588
          %1605 = vst [vmem:[%s262 + $0x20] sm:$0xff] %v1589
          %1606 = vst [vmem:[%s262 + $0x28] sm:$0xff] %v1590
          %1607 = vst [vmem:[%s262 + $0x30] sm:$0xff] %v1591
          %1608 = vst [vmem:[%s262 + $0x38] sm:$0xff] %v1592
          %1609 = vst [vmem:[%s262 + $0x40] sm:$0xff] %v1593
          %1610 = vst [vmem:[%s262 + $0x48] sm:$0xff] %v1594
          %1611 = vst [vmem:[%s262 + $0x50] sm:$0xff] %v1595
          %1612 = vst [vmem:[%s262 + $0x58] sm:$0xff] %v1596
          %1613 = vst [vmem:[%s262 + $0x60] sm:$0xff] %v1597
          %1614 = vst [vmem:[%s262 + $0x68] sm:$0xff] %v1598
          %1615 = vst [vmem:[%s262 + $0x70] sm:$0xff] %v1599
          %1616 = vst [vmem:[%s262 + $0x78] sm:$0xff] %v1600
        $region56: #{tpu_custom_call.1} parent=35 // pred_fallthru
          _
        %s1617 = sand.u32 %s131, 1
        %s1618 = scalar_lea.sflag [#allocation4], %s1617
        %s1619 = sand.u32 %s131, 1
        %s1620 = smul.addr %s1619, 128
        %s1621 = scalar_lea.vmem [#allocation8], %s1620
        // Predicated region
        $region57: #{tpu_custom_call.1} parent=35 // pred_check
          %p1622 = pneg %p141
        $region58: #{tpu_custom_call.1} parent=35 // pred_check_branch
          %1624 = sbr.rel (%p1622) target = $region60
        $region59: #{tpu_custom_call.1} parent=35 // pred_region
          %1626 = vsyncadd %s1618, 0
          %s1627 = smul.addr %s26, 16
          %s1628 = smul.addr %s1627, 8
          %s1629 = scalar_lea.hbm %s4, %s1628
          %s1630 = sshll.u32 %s1621, 4
          %s1631 = int_to_ptr.vmem [resolvable:$true] %s1630
          %s1632 = sshll.u32 %s1629, 4
          %s1633 = int_to_ptr.hbm [resolvable:$true] %s1632
          %1638 = dma.vmem_to_hbm [thread:$0]  %s1631, 2048, %s1633, %s1618, 128, 128, 8
        $region60: #{tpu_custom_call.1} parent=35 // pred_fallthru
          _
      $region36: #{tpu_custom_call.1} parent=5 // pred_fallthru
        _
      %p1639 = scmp.le.s32.totalorder 2, %s17
      // Predicated region
      $region61: #{tpu_custom_call.1} parent=5 // pred_check
        %p1640 = pneg %p1639
      $region62: #{tpu_custom_call.1} parent=5 // pred_check_branch
        %1642 = sbr.rel (%p1640) target = $region64
      $region63: #{tpu_custom_call.1} parent=5 // pred_region
        %s1643 = ssub.s32 %s17, 2
        // Predicated region
        $region65: #{tpu_custom_call.1} parent=63 // pred_check
          %p1644 = pneg %p147
        $region66: #{tpu_custom_call.1} parent=63 // pred_check_branch
          %1646 = sbr.rel (%p1644) target = $region68
        $region67: #{tpu_custom_call.1} parent=63 // pred_region
          %s1647 = sand.u32 %s132, 1
          %s1648 = scalar_lea.sflag [#allocation4], %s1647
          %s1649 = sand.u32 %s132, 1
          %s1650 = smul.addr %s1649, 128
          %s1651 = scalar_lea.vmem [#allocation8], %s1650
          %1653 = dma.done %s1648, 2048
        $region68: #{tpu_custom_call.1} parent=63 // pred_fallthru
          _
      $region64: #{tpu_custom_call.1} parent=5 // pred_fallthru
        _
    $region6: #{tpu_custom_call.1} parent=1 // loop_footer
      %s21 = sadd.s32 1, %s17
    $region7: #{tpu_custom_call.1} parent=1 // loop_footer_branch
      %16 = sbr.rel target = $region3
    $region8: #{tpu_custom_call.1} parent=1 // loop_exit
      _
    %1654 = vsyncpa [#allocation3], 1
    %s1655 = scalar_lea.sflag [#allocation3], 1
    %1656 = vsyncpa %s1655, 1
    %1657 = vsyncpa [#allocation6], 1
    %1658 = vsyncpa [#allocation4], 1
    %s1659 = scalar_lea.sflag [#allocation4], 1
    %1660 = vsyncpa %s1659, 1

</llo_original>
